<compile_context>
chip_gen: v7x
topology: tpu7x:2x2x1
jax: 0.10.0
libtpu: 0.0.40
codegen_flags: <defaults>
</compile_context>

<pallas_src>
import functools

import jax
import jax.numpy as jnp
import numpy as np
from jax.experimental import pallas as pl
from jax.experimental.pallas import tpu as pltpu


# ---------------------------------------------------------------------------
# Host-side weight preparation (done once per model in practice)
# ---------------------------------------------------------------------------
def _fold_bn(gamma, beta, mean, var, conv_bias, eps=1e-5):
    gamma = np.asarray(gamma, np.float32)
    beta = np.asarray(beta, np.float32)
    mean = np.asarray(mean, np.float32)
    var = np.asarray(var, np.float32)
    conv_bias = np.asarray(conv_bias, np.float32)
    scale = gamma / np.sqrt(var + eps)
    shift = beta + (conv_bias - mean) * scale
    return scale, shift


def _build_upsample_matrices(up_w, W):
    """ConvTranspose2d(k=2,s=2) weight -> (2, W*Cin, 2W*Cmid) matmul operands.

    M[di][w*Cin+ci, (2w+dj)*Cmid+c] = up_w[ci, c, di, dj], so that
      x2d(H, W*Cin) @ M[di]  yields the convT output rows of parity `di`,
    already width-interleaved and channel-packed per pixel.
    """
    up_w = np.asarray(up_w, np.float32)                 # (Cin, Cmid, 2, 2)
    Cin, Cmid = up_w.shape[0], up_w.shape[1]
    Wq = 2 * W * Cmid
    M = np.zeros((2, W * Cin, Wq), np.float32)
    for di in range(2):
        for w in range(W):
            for dj in range(2):
                c0 = (2 * w + dj) * Cmid
                M[di, w * Cin:(w + 1) * Cin, c0:c0 + Cmid] = up_w[:, :, di, dj]
    return M


def _build_conv3x3_matrices(w, scale, Ws, row_width, col_of):
    """3x3 conv weight (+ folded BN scale) -> (3, row_width, Ws*Cout) band mats.

    For ky tap dy, a full padded-activation row slab (Hs, row_width) times
    B[dy] contributes to output columns s*Cout+co; kx shifts and channel
    packing are encoded via col_of(padded_pixel, ci).
    """
    w = np.asarray(w, np.float32)                        # (Cout, Cin, 3, 3)
    w = w * np.asarray(scale, np.float32)[:, None, None, None]
    Cout, Cin = w.shape[0], w.shape[1]
    B = np.zeros((3, row_width, Ws * Cout), np.float32)
    for dy in range(3):
        for dx in range(3):
            for ci in range(Cin):
                col_w = w[:, ci, dy, dx]                 # (Cout,)
                for s in range(Ws):
                    B[dy, col_of(s + dx, ci), s * Cout:(s + 1) * Cout] = col_w
    return B


# ---------------------------------------------------------------------------
# Fused kernel
# ---------------------------------------------------------------------------
def _upscaling_kernel(x_ref, skip_ref, wup_ref, bup_ref, b1_ref, sh1_ref,
                      b2_ref, sh2_ref, o_ref, cat_ref, h1_ref, *,
                      H, W, Hs, Ws, Cmid, Csk, Cout, pad_top, pad_left):
    Wp = Ws + 2
    Wq = 2 * W * Cmid
    cdt = cat_ref.dtype

    # Zero staging buffers: covers the 3x3 halo ring and the F.pad region.
    cat_ref[...] = jnp.zeros_like(cat_ref)
    h1_ref[...] = jnp.zeros_like(h1_ref)

    # ---- ConvTranspose2d(k=2, s=2): one matmul per output-row parity --------
    x2d = x_ref[0]                                              # (H, W*Cin)
    y_even = jnp.dot(x2d, wup_ref[0], preferred_element_type=jnp.float32)
    y_odd = jnp.dot(x2d, wup_ref[1], preferred_element_type=jnp.float32)
    # Row interleave (2h / 2h+1) with exact 0/1 selection matmuls (MXU).
    r = jax.lax.broadcasted_iota(jnp.int32, (2 * H, H), 0)
    h = jax.lax.broadcasted_iota(jnp.int32, (2 * H, H), 1)
    p_even = (r == 2 * h).astype(jnp.float32)
    p_odd = (r == 2 * h + 1).astype(jnp.float32)
    up = (jnp.dot(p_even, y_even, preferred_element_type=jnp.float32)
          + jnp.dot(p_odd, y_odd, preferred_element_type=jnp.float32))
    up = up + bup_ref[...]                                      # (2H, Wq)

    # Place convT result and skip into the padded concat buffer (VMEM only).
    cat_ref[pl.ds(1 + pad_top, 2 * H),
            pl.ds((1 + pad_left) * Cmid, Wq)] = up.astype(cdt)
    cat_ref[pl.ds(1, Hs),
            pl.ds(Wp * Cmid + Csk, Ws * Csk)] = skip_ref[0].astype(cdt)

    # ---- Conv3x3 #1 (BN scale folded into weights) + shift + ReLU -----------
    acc = jnp.zeros((Hs, Ws * Cout), jnp.float32)
    for dy in range(3):                       # 3 deep-K matmuls (one per ky)
        acc = acc + jnp.dot(cat_ref[pl.ds(dy, Hs), :], b1_ref[dy],
                            preferred_element_type=jnp.float32)
    h1 = jnp.maximum(acc + sh1_ref[...], 0.0)
    h1_ref[pl.ds(1, Hs), pl.ds(Cout, Ws * Cout)] = h1.astype(cdt)

    # ---- Conv3x3 #2 + shift + ReLU -------------------------------------------
    acc2 = jnp.zeros((Hs, Ws * Cout), jnp.float32)
    for dy in range(3):
        acc2 = acc2 + jnp.dot(h1_ref[pl.ds(dy, Hs), :], b2_ref[dy],
                              preferred_element_type=jnp.float32)
    o_ref[0] = jnp.maximum(acc2 + sh2_ref[...], 0.0).astype(o_ref.dtype)


# ---------------------------------------------------------------------------
# Builder: host-side weight prep + jitted apply(x, skip) in PyTorch NCHW
# ---------------------------------------------------------------------------
def make_upscaling_fn(params, x_shape, skip_shape,
                      compute_dtype=jnp.float32, eps=1e-5):
    B, Cin, H, W = x_shape
    Bs, Csk, Hs, Ws = skip_shape
    assert B == Bs
    Cmid = params["up_w"].shape[1]            # = Cin // 2
    Cout = params["c1_w"].shape[0]
    Ccat = Cmid + Csk                         # = conv1 input channels
    Hp, Wp = Hs + 2, Ws + 2
    diffY, diffX = Hs - 2 * H, Ws - 2 * W
    assert diffY >= 0 and diffX >= 0
    pad_top, pad_left = diffY // 2, diffX // 2
    Wq = 2 * W * Cmid

    # Host-side preprocessing: fold BN, build banded weight matrices.
    w_up = jnp.asarray(_build_upsample_matrices(params["up_w"], W), compute_dtype)
    b_up_row = jnp.asarray(
        np.tile(np.asarray(params["up_b"], np.float32), 2 * W)[None, :])

    s1, sh1 = _fold_bn(params["bn1_g"], params["bn1_b"], params["bn1_m"],
                       params["bn1_v"], params["c1_b"], eps)
    s2, sh2 = _fold_bn(params["bn2_g"], params["bn2_b"], params["bn2_m"],
                       params["bn2_v"], params["c2_b"], eps)

    def col_cat(wp_pix, ci):                  # channel packing of cat rows
        if ci < Cmid:                         # upsampled-x block
            return wp_pix * Cmid + ci
        return Wp * Cmid + wp_pix * Csk + (ci - Cmid)   # skip block

    def col_h1(wp_pix, ci):
        return wp_pix * Cout + ci

    b1 = jnp.asarray(_build_conv3x3_matrices(params["c1_w"], s1, Ws,
                                             Wp * Ccat, col_cat), compute_dtype)
    b2 = jnp.asarray(_build_conv3x3_matrices(params["c2_w"], s2, Ws,
                                             Wp * Cout, col_h1), compute_dtype)
    sh1_row = jnp.asarray(np.tile(sh1, Ws)[None, :])
    sh2_row = jnp.asarray(np.tile(sh2, Ws)[None, :])

    kernel = functools.partial(
        _upscaling_kernel, H=H, W=W, Hs=Hs, Ws=Ws,
        Cmid=Cmid, Csk=Csk, Cout=Cout, pad_top=pad_top, pad_left=pad_left)

    def apply(x_nchw, skip_nchw):
        out_dtype = x_nchw.dtype
        # NCHW -> lane-dense 2-D rows (B, H, W*C); reshape is pure after NHWC.
        x2d = jnp.transpose(x_nchw, (0, 2, 3, 1)).reshape(
            B, H, W * Cin).astype(compute_dtype)
        sk2d = jnp.transpose(skip_nchw, (0, 2, 3, 1)).reshape(
            B, Hs, Ws * Csk).astype(compute_dtype)

        out2d = pl.pallas_call(
            kernel,
            out_shape=jax.ShapeDtypeStruct((B, Hs, Ws * Cout), out_dtype),
            grid=(B,),
            in_specs=[
                pl.BlockSpec((1, H, W * Cin), lambda b: (b, 0, 0)),
                pl.BlockSpec((1, Hs, Ws * Csk), lambda b: (b, 0, 0)),
                pl.BlockSpec((2, W * Cin, Wq), lambda b: (0, 0, 0)),
                pl.BlockSpec((1, Wq), lambda b: (0, 0)),
                pl.BlockSpec((3, Wp * Ccat, Ws * Cout), lambda b: (0, 0, 0)),
                pl.BlockSpec((1, Ws * Cout), lambda b: (0, 0)),
                pl.BlockSpec((3, Wp * Cout, Ws * Cout), lambda b: (0, 0, 0)),
                pl.BlockSpec((1, Ws * Cout), lambda b: (0, 0)),
            ],
            out_specs=pl.BlockSpec((1, Hs, Ws * Cout), lambda b: (b, 0, 0)),
            scratch_shapes=[
                pltpu.VMEM((Hp, Wp * Ccat), compute_dtype),  # padded concat
                pltpu.VMEM((Hp, Wp * Cout), compute_dtype),  # padded conv1 out
            ],
            compiler_params=pltpu.CompilerParams(
                dimension_semantics=("parallel",)),
        )(x2d, sk2d, w_up, b_up_row, b1, sh1_row, b2, sh2_row)

        out = out2d.reshape(B, Hs, Ws, Cout)           # pure reshape
        return jnp.transpose(out, (0, 3, 1, 2))        # NHWC -> NCHW (PyTorch)
        # TODO(synk): for realistic UNet sizes (C>=128, H=W>=64) add a
        # row-tiling grid axis with halo rows so v7x's 64 MiB VMEM is respected
        # and both TensorCores get a multi-step pipelined grid.

    return jax.jit(apply)


# ---------------------------------------------------------------------------
# Pure-JAX reference (for correctness checking)
# ---------------------------------------------------------------------------
def _ref_forward(params, x_nchw, skip_nchw, eps=1e-5):
    x = jnp.transpose(x_nchw, (0, 2, 3, 1))
    skip = jnp.transpose(skip_nchw, (0, 2, 3, 1))
    B, H, W, _ = x.shape
    w = params["up_w"]
    Cmid = w.shape[1]
    y = jnp.einsum('bhwc,coij->bhiwjo', x, w).reshape(B, 2 * H, 2 * W, Cmid)
    y = y + params["up_b"]
    diffY = skip.shape[1] - y.shape[1]
    diffX = skip.shape[2] - y.shape[2]
    y = jnp.pad(y, ((0, 0),
                    (diffY // 2, diffY - diffY // 2),
                    (diffX // 2, diffX - diffX // 2),
                    (0, 0)))
    y = jnp.concatenate([y, skip], axis=-1)

    def cbr(z, w, b, g, be, m, v):
        w_hwio = jnp.transpose(w, (2, 3, 1, 0))
        o = jax.lax.conv_general_dilated(
            z, w_hwio, (1, 1), 'SAME',
            dimension_numbers=('NHWC', 'HWIO', 'NHWC')) + b
        o = (o - m) / jnp.sqrt(v + eps) * g + be
        return jnp.maximum(o, 0.0)

    y = cbr(y, params["c1_w"], params["c1_b"], params["bn1_g"],
            params["bn1_b"], params["bn1_m"], params["bn1_v"])
    y = cbr(y, params["c2_w"], params["c2_b"], params["bn2_g"],
            params["bn2_b"], params["bn2_m"], params["bn2_v"])
    return jnp.transpose(y, (0, 3, 1, 2))


# ---------------------------------------------------------------------------
# Main
# ---------------------------------------------------------------------------
if __name__ == "__main__":
    key = jax.random.PRNGKey(0)
    ks = jax.random.split(key, 16)

    B = 2
    in_channels = 8            # C of x
    out_channels = 8
    H, W = 8, 8                # x spatial
    Cmid = in_channels // 2    # skip channels

    # inputs: x (B, C, H, W), skip (B, C//2, 2H, 2W)  -- PyTorch NCHW
    x = jax.random.normal(ks[0], (B, in_channels, H, W), jnp.float32)
    skip = jax.random.normal(ks[1], (B, Cmid, 2 * H, 2 * W), jnp.float32)

    params = {
        # ConvTranspose2d(in, in//2, k=2, s=2): weight (Cin, Cmid, 2, 2)
        "up_w": 0.1 * jax.random.normal(ks[2], (in_channels, Cmid, 2, 2), jnp.float32),
        "up_b": 0.05 * jax.random.normal(ks[3], (Cmid,), jnp.float32),
        # ConvBlock(in_channels, out_channels)
        "c1_w": 0.1 * jax.random.normal(ks[4], (out_channels, in_channels, 3, 3), jnp.float32),
        "c1_b": 0.05 * jax.random.normal(ks[5], (out_channels,), jnp.float32),
        "bn1_g": 0.5 + jax.random.uniform(ks[6], (out_channels,), jnp.float32),
        "bn1_b": 0.05 * jax.random.normal(ks[7], (out_channels,), jnp.float32),
        "bn1_m": 0.05 * jax.random.normal(ks[8], (out_channels,), jnp.float32),
        "bn1_v": 0.5 + jax.random.uniform(ks[9], (out_channels,), jnp.float32),
        "c2_w": 0.1 * jax.random.normal(ks[10], (out_channels, out_channels, 3, 3), jnp.float32),
        "c2_b": 0.05 * jax.random.normal(ks[11], (out_channels,), jnp.float32),
        "bn2_g": 0.5 + jax.random.uniform(ks[12], (out_channels,), jnp.float32),
        "bn2_b": 0.05 * jax.random.normal(ks[13], (out_channels,), jnp.float32),
        "bn2_m": 0.05 * jax.random.normal(ks[14], (out_channels,), jnp.float32),
        "bn2_v": 0.5 + jax.random.uniform(ks[15], (out_channels,), jnp.float32),
    }

    ref = jax.block_until_ready(_ref_forward(params, x, skip))

    # f32 path (strict check)
    fwd = make_upscaling_fn(params, x.shape, skip.shape, compute_dtype=jnp.float32)
    out = jax.block_until_ready(fwd(x, skip))
    assert out.shape == (B, out_channels, 2 * H, 2 * W), out.shape
    np.testing.assert_allclose(np.asarray(out), np.asarray(ref), rtol=2e-3, atol=2e-3)

    # bf16 matmul-input path (f32 accumulation) -- loose sanity check
    fwd_bf16 = make_upscaling_fn(params, x.shape, skip.shape, compute_dtype=jnp.bfloat16)
    out_bf16 = jax.block_until_ready(fwd_bf16(x, skip))
    np.testing.assert_allclose(np.asarray(out_bf16), np.asarray(ref), rtol=1e-1, atol=1e-1)

    print("KERNEL_OK")
</pallas_src>

<mosaic_0001>
module attributes {stable_mosaic.version = 11 : i64} {
  func.func @_upscaling_kernel(%arg0: i32, %arg1: memref<1x8x64xf32, #tpu.memory_space<vmem>>, %arg2: memref<1x16x64xf32, #tpu.memory_space<vmem>>, %arg3: memref<2x64x64xf32, #tpu.memory_space<vmem>>, %arg4: memref<1x64xf32, #tpu.memory_space<vmem>>, %arg5: memref<3x144x128xf32, #tpu.memory_space<vmem>>, %arg6: memref<1x128xf32, #tpu.memory_space<vmem>>, %arg7: memref<3x144x128xf32, #tpu.memory_space<vmem>>, %arg8: memref<1x128xf32, #tpu.memory_space<vmem>>, %arg9: memref<1x16x128xf32, #tpu.memory_space<vmem>>, %arg10: memref<18x144xf32, #tpu.memory_space<vmem>>, %arg11: memref<18x144xf32, #tpu.memory_space<vmem>>) attributes {dimension_semantics = [#tpu.dimension_semantics<parallel>], iteration_bounds = array<i64: 2>, scalar_prefetch = 0 : i64, scratch_operands = 2 : i64, tpu.core_type = #tpu.core_type<tc>, window_params = [{transform_indices = @transform_0, window_bounds = array<i64: 1, 8, 64>}, {transform_indices = @transform_1, window_bounds = array<i64: 1, 16, 64>}, {pipeline_mode = #tpu.pipeline_mode<synchronous>, transform_indices = @transform_2, window_bounds = array<i64: 2, 64, 64>}, {pipeline_mode = #tpu.pipeline_mode<synchronous>, transform_indices = @transform_3, window_bounds = array<i64: 1, 64>}, {pipeline_mode = #tpu.pipeline_mode<synchronous>, transform_indices = @transform_4, window_bounds = array<i64: 3, 144, 128>}, {pipeline_mode = #tpu.pipeline_mode<synchronous>, transform_indices = @transform_5, window_bounds = array<i64: 1, 128>}, {pipeline_mode = #tpu.pipeline_mode<synchronous>, transform_indices = @transform_6, window_bounds = array<i64: 3, 144, 128>}, {pipeline_mode = #tpu.pipeline_mode<synchronous>, transform_indices = @transform_7, window_bounds = array<i64: 1, 128>}, {transform_indices = @transform_8, window_bounds = array<i64: 1, 16, 128>}]} {
    %cst = arith.constant 0.000000e+00 : f32
    %0 = vector.broadcast %cst : f32 to vector<18x144xf32>
    %c0 = arith.constant 0 : index
    %c0_0 = arith.constant 0 : index
    %1 = vector.load %arg10[%c0, %c0_0] : memref<18x144xf32, #tpu.memory_space<vmem>>, vector<18x144xf32>
    tpu.vector_store %arg10[%c0, %c0_0], %0 {strides = array<i32>} : memref<18x144xf32, #tpu.memory_space<vmem>>, vector<18x144xf32>,
    %cst_1 = arith.constant 0.000000e+00 : f32
    %2 = vector.broadcast %cst_1 : f32 to vector<18x144xf32>
    %c0_2 = arith.constant 0 : index
    %c0_3 = arith.constant 0 : index
    %3 = vector.load %arg11[%c0_2, %c0_3] : memref<18x144xf32, #tpu.memory_space<vmem>>, vector<18x144xf32>
    tpu.vector_store %arg11[%c0_2, %c0_3], %2 {strides = array<i32>} : memref<18x144xf32, #tpu.memory_space<vmem>>, vector<18x144xf32>,
    %c0_4 = arith.constant 0 : index
    %c0_5 = arith.constant 0 : index
    %c0_6 = arith.constant 0 : index
    %4 = vector.load %arg1[%c0_4, %c0_5, %c0_6] : memref<1x8x64xf32, #tpu.memory_space<vmem>>, vector<1x8x64xf32>
    %5 = vector.shape_cast %4 : vector<1x8x64xf32> to vector<8x64xf32>
    %c0_7 = arith.constant 0 : index
    %c0_8 = arith.constant 0 : index
    %c0_9 = arith.constant 0 : index
    %6 = vector.load %arg3[%c0_7, %c0_8, %c0_9] : memref<2x64x64xf32, #tpu.memory_space<vmem>>, vector<1x64x64xf32>
    %7 = vector.shape_cast %6 : vector<1x64x64xf32> to vector<64x64xf32>
    %cst_10 = arith.constant dense<0.000000e+00> : vector<8x64xf32>
    %8 = tpu.matmul %5, %7, %cst_10 {dimension_numbers = #tpu.dot_dimension_numbers<[1], [0], [0], [1], [0, 0, 1, 1], [], []>} : vector<8x64xf32>, vector<64x64xf32>, vector<8x64xf32> -> vector<8x64xf32>
    %c1 = arith.constant 1 : index
    %c0_11 = arith.constant 0 : index
    %c0_12 = arith.constant 0 : index
    %9 = vector.load %arg3[%c1, %c0_11, %c0_12] : memref<2x64x64xf32, #tpu.memory_space<vmem>>, vector<1x64x64xf32>
    %10 = vector.shape_cast %9 : vector<1x64x64xf32> to vector<64x64xf32>
    %cst_13 = arith.constant dense<0.000000e+00> : vector<8x64xf32>
    %11 = tpu.matmul %5, %10, %cst_13 {dimension_numbers = #tpu.dot_dimension_numbers<[1], [0], [0], [1], [0, 0, 1, 1], [], []>} : vector<8x64xf32>, vector<64x64xf32>, vector<8x64xf32> -> vector<8x64xf32>
    %12 = tpu.iota {dimensions = array<i32: 0>} : vector<16x8xi32>
    %13 = tpu.iota {dimensions = array<i32: 1>} : vector<16x8xi32>
    %c2_i32 = arith.constant 2 : i32
    %14 = vector.broadcast %c2_i32 : i32 to vector<16x8xi32>
    %15 = arith.muli %14, %13 : vector<16x8xi32>
    %16 = arith.cmpi eq, %12, %15 : vector<16x8xi32>
    %17 = arith.extui %16 : vector<16x8xi1> to vector<16x8xi32>
    %18 = arith.sitofp %17 : vector<16x8xi32> to vector<16x8xf32>
    %c2_i32_14 = arith.constant 2 : i32
    %19 = vector.broadcast %c2_i32_14 : i32 to vector<16x8xi32>
    %20 = arith.muli %19, %13 : vector<16x8xi32>
    %c1_i32 = arith.constant 1 : i32
    %21 = vector.broadcast %c1_i32 : i32 to vector<16x8xi32>
    %22 = arith.addi %20, %21 : vector<16x8xi32>
    %23 = arith.cmpi eq, %12, %22 : vector<16x8xi32>
    %24 = arith.extui %23 : vector<16x8xi1> to vector<16x8xi32>
    %25 = arith.sitofp %24 : vector<16x8xi32> to vector<16x8xf32>
    %cst_15 = arith.constant dense<0.000000e+00> : vector<16x64xf32>
    %26 = tpu.matmul %18, %8, %cst_15 {dimension_numbers = #tpu.dot_dimension_numbers<[1], [0], [0], [1], [0, 0, 1, 1], [], []>} : vector<16x8xf32>, vector<8x64xf32>, vector<16x64xf32> -> vector<16x64xf32>
    %cst_16 = arith.constant dense<0.000000e+00> : vector<16x64xf32>
    %27 = tpu.matmul %25, %11, %cst_16 {dimension_numbers = #tpu.dot_dimension_numbers<[1], [0], [0], [1], [0, 0, 1, 1], [], []>} : vector<16x8xf32>, vector<8x64xf32>, vector<16x64xf32> -> vector<16x64xf32>
    %28 = arith.addf %26, %27 : vector<16x64xf32>
    %c0_17 = arith.constant 0 : index
    %c0_18 = arith.constant 0 : index
    %29 = vector.load %arg4[%c0_17, %c0_18] : memref<1x64xf32, #tpu.memory_space<vmem>>, vector<1x64xf32>
    %30 = vector.broadcast %29 : vector<1x64xf32> to vector<16x64xf32>
    %31 = arith.addf %28, %30 : vector<16x64xf32>
    %c1_19 = arith.constant 1 : index
    %c4 = arith.constant 4 : index
    %32 = vector.load %arg10[%c1_19, %c4] : memref<18x144xf32, #tpu.memory_space<vmem>>, vector<16x64xf32>
    tpu.vector_store %arg10[%c1_19, %c4], %31 {strides = array<i32>} : memref<18x144xf32, #tpu.memory_space<vmem>>, vector<16x64xf32>,
    %c0_20 = arith.constant 0 : index
    %c0_21 = arith.constant 0 : index
    %c0_22 = arith.constant 0 : index
    %33 = vector.load %arg2[%c0_20, %c0_21, %c0_22] : memref<1x16x64xf32, #tpu.memory_space<vmem>>, vector<1x16x64xf32>
    %34 = vector.shape_cast %33 : vector<1x16x64xf32> to vector<16x64xf32>
    %c1_23 = arith.constant 1 : index
    %c76 = arith.constant 76 : index
    %35 = vector.load %arg10[%c1_23, %c76] : memref<18x144xf32, #tpu.memory_space<vmem>>, vector<16x64xf32>
    tpu.vector_store %arg10[%c1_23, %c76], %34 {strides = array<i32>} : memref<18x144xf32, #tpu.memory_space<vmem>>, vector<16x64xf32>,
    %cst_24 = arith.constant 0.000000e+00 : f32
    %36 = vector.broadcast %cst_24 : f32 to vector<16x128xf32>
    %c0_25 = arith.constant 0 : index
    %c0_26 = arith.constant 0 : index
    %37 = vector.load %arg10[%c0_25, %c0_26] : memref<18x144xf32, #tpu.memory_space<vmem>>, vector<16x144xf32>
    %c0_27 = arith.constant 0 : index
    %c0_28 = arith.constant 0 : index
    %c0_29 = arith.constant 0 : index
    %38 = vector.load %arg5[%c0_27, %c0_28, %c0_29] : memref<3x144x128xf32, #tpu.memory_space<vmem>>, vector<1x144x128xf32>
    %39 = vector.shape_cast %38 : vector<1x144x128xf32> to vector<144x128xf32>
    %cst_30 = arith.constant dense<0.000000e+00> : vector<16x128xf32>
    %40 = tpu.matmul %37, %39, %cst_30 {dimension_numbers = #tpu.dot_dimension_numbers<[1], [0], [0], [1], [0, 0, 1, 1], [], []>} : vector<16x144xf32>, vector<144x128xf32>, vector<16x128xf32> -> vector<16x128xf32>
    %41 = arith.addf %36, %40 : vector<16x128xf32>
    %c1_31 = arith.constant 1 : index
    %c0_32 = arith.constant 0 : index
    %42 = vector.load %arg10[%c1_31, %c0_32] : memref<18x144xf32, #tpu.memory_space<vmem>>, vector<16x144xf32>
    %c1_33 = arith.constant 1 : index
    %c0_34 = arith.constant 0 : index
    %c0_35 = arith.constant 0 : index
    %43 = vector.load %arg5[%c1_33, %c0_34, %c0_35] : memref<3x144x128xf32, #tpu.memory_space<vmem>>, vector<1x144x128xf32>
    %44 = vector.shape_cast %43 : vector<1x144x128xf32> to vector<144x128xf32>
    %cst_36 = arith.constant dense<0.000000e+00> : vector<16x128xf32>
    %45 = tpu.matmul %42, %44, %cst_36 {dimension_numbers = #tpu.dot_dimension_numbers<[1], [0], [0], [1], [0, 0, 1, 1], [], []>} : vector<16x144xf32>, vector<144x128xf32>, vector<16x128xf32> -> vector<16x128xf32>
    %46 = arith.addf %41, %45 : vector<16x128xf32>
    %c2 = arith.constant 2 : index
    %c0_37 = arith.constant 0 : index
    %47 = vector.load %arg10[%c2, %c0_37] : memref<18x144xf32, #tpu.memory_space<vmem>>, vector<16x144xf32>
    %c2_38 = arith.constant 2 : index
    %c0_39 = arith.constant 0 : index
    %c0_40 = arith.constant 0 : index
    %48 = vector.load %arg5[%c2_38, %c0_39, %c0_40] : memref<3x144x128xf32, #tpu.memory_space<vmem>>, vector<1x144x128xf32>
    %49 = vector.shape_cast %48 : vector<1x144x128xf32> to vector<144x128xf32>
    %cst_41 = arith.constant dense<0.000000e+00> : vector<16x128xf32>
    %50 = tpu.matmul %47, %49, %cst_41 {dimension_numbers = #tpu.dot_dimension_numbers<[1], [0], [0], [1], [0, 0, 1, 1], [], []>} : vector<16x144xf32>, vector<144x128xf32>, vector<16x128xf32> -> vector<16x128xf32>
    %51 = arith.addf %46, %50 : vector<16x128xf32>
    %c0_42 = arith.constant 0 : index
    %c0_43 = arith.constant 0 : index
    %52 = vector.load %arg6[%c0_42, %c0_43] : memref<1x128xf32, #tpu.memory_space<vmem>>, vector<1x128xf32>
    %53 = vector.broadcast %52 : vector<1x128xf32> to vector<16x128xf32>
    %54 = arith.addf %51, %53 : vector<16x128xf32>
    %cst_44 = arith.constant 0.000000e+00 : f32
    %55 = vector.broadcast %cst_44 : f32 to vector<16x128xf32>
    %56 = arith.maximumf %54, %55 : vector<16x128xf32>
    %c1_45 = arith.constant 1 : index
    %c8 = arith.constant 8 : index
    %57 = vector.load %arg11[%c1_45, %c8] : memref<18x144xf32, #tpu.memory_space<vmem>>, vector<16x128xf32>
    tpu.vector_store %arg11[%c1_45, %c8], %56 {strides = array<i32>} : memref<18x144xf32, #tpu.memory_space<vmem>>, vector<16x128xf32>,
    %cst_46 = arith.constant 0.000000e+00 : f32
    %58 = vector.broadcast %cst_46 : f32 to vector<16x128xf32>
    %c0_47 = arith.constant 0 : index
    %c0_48 = arith.constant 0 : index
    %59 = vector.load %arg11[%c0_47, %c0_48] : memref<18x144xf32, #tpu.memory_space<vmem>>, vector<16x144xf32>
    %c0_49 = arith.constant 0 : index
    %c0_50 = arith.constant 0 : index
    %c0_51 = arith.constant 0 : index
    %60 = vector.load %arg7[%c0_49, %c0_50, %c0_51] : memref<3x144x128xf32, #tpu.memory_space<vmem>>, vector<1x144x128xf32>
    %61 = vector.shape_cast %60 : vector<1x144x128xf32> to vector<144x128xf32>
    %cst_52 = arith.constant dense<0.000000e+00> : vector<16x128xf32>
    %62 = tpu.matmul %59, %61, %cst_52 {dimension_numbers = #tpu.dot_dimension_numbers<[1], [0], [0], [1], [0, 0, 1, 1], [], []>} : vector<16x144xf32>, vector<144x128xf32>, vector<16x128xf32> -> vector<16x128xf32>
    %63 = arith.addf %58, %62 : vector<16x128xf32>
    %c1_53 = arith.constant 1 : index
    %c0_54 = arith.constant 0 : index
    %64 = vector.load %arg11[%c1_53, %c0_54] : memref<18x144xf32, #tpu.memory_space<vmem>>, vector<16x144xf32>
    %c1_55 = arith.constant 1 : index
    %c0_56 = arith.constant 0 : index
    %c0_57 = arith.constant 0 : index
    %65 = vector.load %arg7[%c1_55, %c0_56, %c0_57] : memref<3x144x128xf32, #tpu.memory_space<vmem>>, vector<1x144x128xf32>
    %66 = vector.shape_cast %65 : vector<1x144x128xf32> to vector<144x128xf32>
    %cst_58 = arith.constant dense<0.000000e+00> : vector<16x128xf32>
    %67 = tpu.matmul %64, %66, %cst_58 {dimension_numbers = #tpu.dot_dimension_numbers<[1], [0], [0], [1], [0, 0, 1, 1], [], []>} : vector<16x144xf32>, vector<144x128xf32>, vector<16x128xf32> -> vector<16x128xf32>
    %68 = arith.addf %63, %67 : vector<16x128xf32>
    %c2_59 = arith.constant 2 : index
    %c0_60 = arith.constant 0 : index
    %69 = vector.load %arg11[%c2_59, %c0_60] : memref<18x144xf32, #tpu.memory_space<vmem>>, vector<16x144xf32>
    %c2_61 = arith.constant 2 : index
    %c0_62 = arith.constant 0 : index
    %c0_63 = arith.constant 0 : index
    %70 = vector.load %arg7[%c2_61, %c0_62, %c0_63] : memref<3x144x128xf32, #tpu.memory_space<vmem>>, vector<1x144x128xf32>
    %71 = vector.shape_cast %70 : vector<1x144x128xf32> to vector<144x128xf32>
    %cst_64 = arith.constant dense<0.000000e+00> : vector<16x128xf32>
    %72 = tpu.matmul %69, %71, %cst_64 {dimension_numbers = #tpu.dot_dimension_numbers<[1], [0], [0], [1], [0, 0, 1, 1], [], []>} : vector<16x144xf32>, vector<144x128xf32>, vector<16x128xf32> -> vector<16x128xf32>
    %73 = arith.addf %68, %72 : vector<16x128xf32>
    %c0_65 = arith.constant 0 : index
    %c0_66 = arith.constant 0 : index
    %74 = vector.load %arg8[%c0_65, %c0_66] : memref<1x128xf32, #tpu.memory_space<vmem>>, vector<1x128xf32>
    %75 = vector.broadcast %74 : vector<1x128xf32> to vector<16x128xf32>
    %76 = arith.addf %73, %75 : vector<16x128xf32>
    %cst_67 = arith.constant 0.000000e+00 : f32
    %77 = vector.broadcast %cst_67 : f32 to vector<16x128xf32>
    %78 = arith.maximumf %76, %77 : vector<16x128xf32>
    %c0_68 = arith.constant 0 : index
    %c0_69 = arith.constant 0 : index
    %c0_70 = arith.constant 0 : index
    %79 = vector.load %arg9[%c0_68, %c0_69, %c0_70] : memref<1x16x128xf32, #tpu.memory_space<vmem>>, vector<1x16x128xf32>
    %80 = vector.shape_cast %79 : vector<1x16x128xf32> to vector<16x128xf32>
    %81 = vector.shape_cast %78 : vector<16x128xf32> to vector<1x16x128xf32>
    tpu.vector_store %arg9[%c0_68, %c0_69, %c0_70], %81 {strides = array<i32>} : memref<1x16x128xf32, #tpu.memory_space<vmem>>, vector<1x16x128xf32>,
    return
  }
  func.func @transform_0(%arg0: i32) -> (i32, i32, i32) {
    %c0_i32 = arith.constant 0 : i32
    %c0_i32_0 = arith.constant 0 : i32
    %c0_i32_1 = arith.constant 0 : i32
    return %arg0, %c0_i32, %c0_i32_0 : i32, i32, i32
  }
  func.func @transform_1(%arg0: i32) -> (i32, i32, i32) {
    %c0_i32 = arith.constant 0 : i32
    %c0_i32_0 = arith.constant 0 : i32
    %c0_i32_1 = arith.constant 0 : i32
    return %arg0, %c0_i32, %c0_i32_0 : i32, i32, i32
  }
  func.func @transform_2(%arg0: i32) -> (i32, i32, i32) {
    %c0_i32 = arith.constant 0 : i32
    %c0_i32_0 = arith.constant 0 : i32
    %c0_i32_1 = arith.constant 0 : i32
    %c0_i32_2 = arith.constant 0 : i32
    return %c0_i32, %c0_i32_0, %c0_i32_1 : i32, i32, i32
  }
  func.func @transform_3(%arg0: i32) -> (i32, i32) {
    %c0_i32 = arith.constant 0 : i32
    %c0_i32_0 = arith.constant 0 : i32
    %c0_i32_1 = arith.constant 0 : i32
    return %c0_i32, %c0_i32_0 : i32, i32
  }
  func.func @transform_4(%arg0: i32) -> (i32, i32, i32) {
    %c0_i32 = arith.constant 0 : i32
    %c0_i32_0 = arith.constant 0 : i32
    %c0_i32_1 = arith.constant 0 : i32
    %c0_i32_2 = arith.constant 0 : i32
    return %c0_i32, %c0_i32_0, %c0_i32_1 : i32, i32, i32
  }
  func.func @transform_5(%arg0: i32) -> (i32, i32) {
    %c0_i32 = arith.constant 0 : i32
    %c0_i32_0 = arith.constant 0 : i32
    %c0_i32_1 = arith.constant 0 : i32
    return %c0_i32, %c0_i32_0 : i32, i32
  }
  func.func @transform_6(%arg0: i32) -> (i32, i32, i32) {
    %c0_i32 = arith.constant 0 : i32
    %c0_i32_0 = arith.constant 0 : i32
    %c0_i32_1 = arith.constant 0 : i32
    %c0_i32_2 = arith.constant 0 : i32
    return %c0_i32, %c0_i32_0, %c0_i32_1 : i32, i32, i32
  }
  func.func @transform_7(%arg0: i32) -> (i32, i32) {
    %c0_i32 = arith.constant 0 : i32
    %c0_i32_0 = arith.constant 0 : i32
    %c0_i32_1 = arith.constant 0 : i32
    return %c0_i32, %c0_i32_0 : i32, i32
  }
  func.func @transform_8(%arg0: i32) -> (i32, i32, i32) {
    %c0_i32 = arith.constant 0 : i32
    %c0_i32_0 = arith.constant 0 : i32
    %c0_i32_1 = arith.constant 0 : i32
    return %arg0, %c0_i32, %c0_i32_0 : i32, i32, i32
  }
}

</mosaic_0001>

<llo_original>
// kernel: apply.1
$region0: #{apply.1}
  #allocation0 [shape = 'u32[]', space=smem, size = 0x4, offset = 0x4, fixed_abs, tag = 'smem constant byte address 0x4 - core index']
  #allocation1 [shape = 'u32[144,128]{1,0:T(1,128)}', space=vmem, size = 0x12000, scoped, tag = 'internal scratch']
  #allocation2 [shape = 'f32[18,144]{1,0:T(8,128)}', space=vmem, size = 0x6000, scoped, tag = 'scratch operand']
  #allocation3 [shape = 'f32[18,144]{1,0:T(8,128)}', space=vmem, size = 0x6000, scoped, tag = 'scratch operand']
  %s0 = inlined_call_operand.vmem [shape: f32[2,8,64], index: 0, kind: input, shape index: {}]
  %s1 = inlined_call_operand.vmem [shape: f32[2,16,64], index: 1, kind: input, shape index: {}]
  %s2 = inlined_call_operand.vmem [shape: f32[2,64,64], index: 2, kind: input, shape index: {}]
  %s3 = inlined_call_operand.vmem [shape: f32[1,64], index: 3, kind: input, shape index: {}]
  %s4 = inlined_call_operand.hbm [shape: f32[3,144,128], index: 4, kind: input, shape index: {}]
  %s5 = inlined_call_operand.vmem [shape: f32[1,128], index: 5, kind: input, shape index: {}]
  %s6 = inlined_call_operand.vmem [shape: f32[3,144,128], index: 6, kind: input, shape index: {}]
  %s7 = inlined_call_operand.vmem [shape: f32[1,128], index: 7, kind: input, shape index: {}]
  %s8 = inlined_call_operand.vmem [shape: f32[2,16,128], index: 8, kind: output, shape index: {}]
  %s9 = sld [smem:[#allocation0]]
  $region69: #{apply.1} parent=0
    _
  %s11 = ssub.s32 1, %s9
  %s12 = scalar_select 0, %s11, %s9
  $region1: #{apply.1} parent=0
    #allocation4 [shape = 'u8[221184]{0}', space=vmem, size = 0x36000, scoped, tag = 'input window, operand 4, single buffered']
    #allocation5 [shape = 's32[2]{0}', space=sflag, size = 0x8, scoped, tag = 'scoped memory for apply.1']
    %13 = vsyncpa [#allocation5], 0
    loop: start=0, step=1, limit=4
    $region2: #{apply.1} parent=1 // loop_pre_header
      _
    $region3: #{apply.1} parent=1 // loop_header
      %s15 = sphi 0, %s19
      %p16 = scmp.ge.s32.totalorder %s15, 4
      %s25 = sphi 0, %s27
      %s28 = sphi 0, %s25
      %s29 = sphi 0, %s28
      %s45 = sphi 0, %s29
      %s51 = sphi 0, %s53
      %s54 = sphi 0, %s51
      %s55 = sphi 0, %s54
      %s71 = sphi 0, %s55
      %s75 = sphi 0, %s75
      %s77 = sphi 0, %s75
      %s78 = sphi 0, %s77
      %s92 = sphi 0, %s78
      %s96 = sphi 0, %s96
      %s98 = sphi 0, %s96
      %s99 = sphi 0, %s98
      %s113 = sphi 0, %s99
      %s117 = sphi 0, %s117
      %s119 = sphi 0, %s117
      %s120 = sphi 0, %s119
      %s134 = sphi 0, %s120
      %s138 = sphi 0, %s138
      %s140 = sphi 0, %s138
      %s141 = sphi 0, %s140
      %s155 = sphi 0, %s141
      %s159 = sphi 0, %s159
      %s161 = sphi 0, %s159
      %s162 = sphi 0, %s161
      %s176 = sphi 0, %s162
      %s180 = sphi 0, %s180
      %s182 = sphi 0, %s180
      %s183 = sphi 0, %s182
      %s197 = sphi 0, %s183
      %s203 = sphi 0, %s205
      %s206 = sphi 0, %s203
      %s207 = sphi 0, %s206
      %s223 = sphi 0, %s207
    $region4: #{apply.1} parent=1 // loop_header_branch
      %18 = sbr.rel (%p16) target = $region8
    $region5: #{apply.1} parent=1 // loop_body
      %s20 = ssub.s32 %s15, 1
      %s21 = ssub.s32 %s15, 2
      %s22 = sadd.s32 %s15, 1
      %s23 = ssub.s32 %s15, %s22
      %p24 = scmp.eq.s32.totalorder %s23, 0
      %s26 = sadd.s32 %s25, 1
      %s27 = scalar_select %p24, %s25, %s26
      %p30 = pneg %p24
      %p31 = scmp.eq.s32.totalorder %s15, 1
      %p32 = por %p30, %p31
      %p33 = scmp.ne.s32.totalorder %s25, %s28
      %p34 = scmp.eq.s32.totalorder %s15, 0
      %p35 = por %p33, %p34
      %p36 = scmp.ne.s32.totalorder %s25, %s28
      %p37 = scmp.eq.s32.totalorder %s20, 1
      %p38 = por %p36, %p37
      %p39 = scmp.ne.s32.totalorder %s28, %s29
      %p40 = scmp.eq.s32.totalorder %s20, 0
      %p41 = por %p39, %p40
      %p42 = scmp.ne.s32.totalorder %s28, %s29
      %p43 = scmp.eq.s32.totalorder %s21, 1
      %p44 = por %p42, %p43
      %p46 = scmp.ne.s32.totalorder %s29, %s45
      %p47 = scmp.eq.s32.totalorder %s21, 0
      %p48 = por %p46, %p47
      %s49 = ssub.s32 %s15, %s22
      %p50 = scmp.eq.s32.totalorder %s49, 0
      %s52 = sadd.s32 %s51, 1
      %s53 = scalar_select %p50, %s51, %s52
      %p56 = pneg %p50
      %p57 = scmp.eq.s32.totalorder %s15, 1
      %p58 = por %p56, %p57
      %p59 = scmp.ne.s32.totalorder %s51, %s54
      %p60 = scmp.eq.s32.totalorder %s15, 0
      %p61 = por %p59, %p60
      %p62 = scmp.ne.s32.totalorder %s51, %s54
      %p63 = scmp.eq.s32.totalorder %s20, 1
      %p64 = por %p62, %p63
      %p65 = scmp.ne.s32.totalorder %s54, %s55
      %p66 = scmp.eq.s32.totalorder %s20, 0
      %p67 = por %p65, %p66
      %p68 = scmp.ne.s32.totalorder %s54, %s55
      %p69 = scmp.eq.s32.totalorder %s21, 1
      %p70 = por %p68, %p69
      %p72 = scmp.ne.s32.totalorder %s55, %s71
      %p73 = scmp.eq.s32.totalorder %s21, 0
      %p74 = por %p72, %p73
      %s76 = sadd.s32 %s75, 1
      %p79 = scmp.eq.s32.totalorder %s15, 1
      %p80 = scmp.ne.s32.totalorder %s75, %s77
      %p81 = scmp.eq.s32.totalorder %s15, 0
      %p82 = por %p80, %p81
      %p83 = scmp.ne.s32.totalorder %s75, %s77
      %p84 = scmp.eq.s32.totalorder %s20, 1
      %p85 = por %p83, %p84
      %p86 = scmp.ne.s32.totalorder %s77, %s78
      %p87 = scmp.eq.s32.totalorder %s20, 0
      %p88 = por %p86, %p87
      %p89 = scmp.ne.s32.totalorder %s77, %s78
      %p90 = scmp.eq.s32.totalorder %s21, 1
      %p91 = por %p89, %p90
      %p93 = scmp.ne.s32.totalorder %s78, %s92
      %p94 = scmp.eq.s32.totalorder %s21, 0
      %p95 = por %p93, %p94
      %s97 = sadd.s32 %s96, 1
      %p100 = scmp.eq.s32.totalorder %s15, 1
      %p101 = scmp.ne.s32.totalorder %s96, %s98
      %p102 = scmp.eq.s32.totalorder %s15, 0
      %p103 = por %p101, %p102
      %p104 = scmp.ne.s32.totalorder %s96, %s98
      %p105 = scmp.eq.s32.totalorder %s20, 1
      %p106 = por %p104, %p105
      %p107 = scmp.ne.s32.totalorder %s98, %s99
      %p108 = scmp.eq.s32.totalorder %s20, 0
      %p109 = por %p107, %p108
      %p110 = scmp.ne.s32.totalorder %s98, %s99
      %p111 = scmp.eq.s32.totalorder %s21, 1
      %p112 = por %p110, %p111
      %p114 = scmp.ne.s32.totalorder %s99, %s113
      %p115 = scmp.eq.s32.totalorder %s21, 0
      %p116 = por %p114, %p115
      %s118 = sadd.s32 %s117, 1
      %p121 = scmp.eq.s32.totalorder %s15, 1
      %p122 = scmp.ne.s32.totalorder %s117, %s119
      %p123 = scmp.eq.s32.totalorder %s15, 0
      %p124 = por %p122, %p123
      %p125 = scmp.ne.s32.totalorder %s117, %s119
      %p126 = scmp.eq.s32.totalorder %s20, 1
      %p127 = por %p125, %p126
      %p128 = scmp.ne.s32.totalorder %s119, %s120
      %p129 = scmp.eq.s32.totalorder %s20, 0
      %p130 = por %p128, %p129
      %p131 = scmp.ne.s32.totalorder %s119, %s120
      %p132 = scmp.eq.s32.totalorder %s21, 1
      %p133 = por %p131, %p132
      %p135 = scmp.ne.s32.totalorder %s120, %s134
      %p136 = scmp.eq.s32.totalorder %s21, 0
      %p137 = por %p135, %p136
      %s139 = sadd.s32 %s138, 1
      %p142 = scmp.eq.s32.totalorder %s15, 1
      %p143 = scmp.ne.s32.totalorder %s138, %s140
      %p144 = scmp.eq.s32.totalorder %s15, 0
      %p145 = por %p143, %p144
      %p146 = scmp.ne.s32.totalorder %s138, %s140
      %p147 = scmp.eq.s32.totalorder %s20, 1
      %p148 = por %p146, %p147
      %p149 = scmp.ne.s32.totalorder %s140, %s141
      %p150 = scmp.eq.s32.totalorder %s20, 0
      %p151 = por %p149, %p150
      %p152 = scmp.ne.s32.totalorder %s140, %s141
      %p153 = scmp.eq.s32.totalorder %s21, 1
      %p154 = por %p152, %p153
      %p156 = scmp.ne.s32.totalorder %s141, %s155
      %p157 = scmp.eq.s32.totalorder %s21, 0
      %p158 = por %p156, %p157
      %s160 = sadd.s32 %s159, 1
      %p163 = scmp.eq.s32.totalorder %s15, 1
      %p164 = scmp.ne.s32.totalorder %s159, %s161
      %p165 = scmp.eq.s32.totalorder %s15, 0
      %p166 = por %p164, %p165
      %p167 = scmp.ne.s32.totalorder %s159, %s161
      %p168 = scmp.eq.s32.totalorder %s20, 1
      %p169 = por %p167, %p168
      %p170 = scmp.ne.s32.totalorder %s161, %s162
      %p171 = scmp.eq.s32.totalorder %s20, 0
      %p172 = por %p170, %p171
      %p173 = scmp.ne.s32.totalorder %s161, %s162
      %p174 = scmp.eq.s32.totalorder %s21, 1
      %p175 = por %p173, %p174
      %p177 = scmp.ne.s32.totalorder %s162, %s176
      %p178 = scmp.eq.s32.totalorder %s21, 0
      %p179 = por %p177, %p178
      %s181 = sadd.s32 %s180, 1
      %p184 = scmp.eq.s32.totalorder %s15, 1
      %p185 = scmp.ne.s32.totalorder %s180, %s182
      %p186 = scmp.eq.s32.totalorder %s15, 0
      %p187 = por %p185, %p186
      %p188 = scmp.ne.s32.totalorder %s180, %s182
      %p189 = scmp.eq.s32.totalorder %s20, 1
      %p190 = por %p188, %p189
      %p191 = scmp.ne.s32.totalorder %s182, %s183
      %p192 = scmp.eq.s32.totalorder %s20, 0
      %p193 = por %p191, %p192
      %p194 = scmp.ne.s32.totalorder %s182, %s183
      %p195 = scmp.eq.s32.totalorder %s21, 1
      %p196 = por %p194, %p195
      %p198 = scmp.ne.s32.totalorder %s183, %s197
      %p199 = scmp.eq.s32.totalorder %s21, 0
      %p200 = por %p198, %p199
      %s201 = ssub.s32 %s15, %s22
      %p202 = scmp.eq.s32.totalorder %s201, 0
      %s204 = sadd.s32 %s203, 1
      %s205 = scalar_select %p202, %s203, %s204
      %p208 = pneg %p202
      %p209 = scmp.eq.s32.totalorder %s15, 1
      %p210 = por %p208, %p209
      %p211 = scmp.ne.s32.totalorder %s203, %s206
      %p212 = scmp.eq.s32.totalorder %s15, 0
      %p213 = por %p211, %p212
      %p214 = scmp.ne.s32.totalorder %s203, %s206
      %p215 = scmp.eq.s32.totalorder %s20, 1
      %p216 = por %p214, %p215
      %p217 = scmp.ne.s32.totalorder %s206, %s207
      %p218 = scmp.eq.s32.totalorder %s20, 0
      %p219 = por %p217, %p218
      %p220 = scmp.ne.s32.totalorder %s206, %s207
      %p221 = scmp.eq.s32.totalorder %s21, 1
      %p222 = por %p220, %p221
      %p224 = scmp.ne.s32.totalorder %s207, %s223
      %p225 = scmp.eq.s32.totalorder %s21, 0
      %p226 = por %p224, %p225
      %p227 = scmp.le.s32.totalorder 1, %s15
      %p228 = scmp.lt.s32.totalorder %s15, 3
      %p229 = pnand %p227, %p228
      %p230 = pneg %p229
      // Predicated region
      $region9: #{apply.1} parent=5 // pred_check
        _
      $region10: #{apply.1} parent=5 // pred_check_branch
        %232 = sbr.rel (%p229) target = $region12
      $region11: #{apply.1} parent=5 // pred_region
        %s233 = ssub.s32 %s15, 1
        // Predicated region
        $region13: #{apply.1} parent=11 // pred_check
          %p234 = pneg %p88
        $region14: #{apply.1} parent=11 // pred_check_branch
          %236 = sbr.rel (%p234) target = $region16
        $region15: #{apply.1} parent=11 // pred_region
          _
        $region16: #{apply.1} parent=11 // pred_fallthru
          _
        // Predicated region
        $region17: #{apply.1} parent=11 // pred_check
          %p237 = pneg %p109
        $region18: #{apply.1} parent=11 // pred_check_branch
          %239 = sbr.rel (%p237) target = $region20
        $region19: #{apply.1} parent=11 // pred_region
          _
        $region20: #{apply.1} parent=11 // pred_fallthru
          _
        // Predicated region
        $region21: #{apply.1} parent=11 // pred_check
          %p240 = pneg %p130
        $region22: #{apply.1} parent=11 // pred_check_branch
          %242 = sbr.rel (%p240) target = $region24
        $region23: #{apply.1} parent=11 // pred_region
          %s244 = ssub.s32 6912, 6912
          %245 = vsyncadd [#allocation5], %s244
          %s246 = sshll.u32 [#allocation4], 4
          %s247 = int_to_ptr.vmem [resolvable:$true] %s246
          %252 = dma.hbm_to_vmem [thread:$0]  %s4, 6912, %s247, [#allocation5], 128, 128, 8
        $region24: #{apply.1} parent=11 // pred_fallthru
          _
        // Predicated region
        $region25: #{apply.1} parent=11 // pred_check
          %p253 = pneg %p151
        $region26: #{apply.1} parent=11 // pred_check_branch
          %255 = sbr.rel (%p253) target = $region28
        $region27: #{apply.1} parent=11 // pred_region
          _
        $region28: #{apply.1} parent=11 // pred_fallthru
          _
        // Predicated region
        $region29: #{apply.1} parent=11 // pred_check
          %p256 = pneg %p172
        $region30: #{apply.1} parent=11 // pred_check_branch
          %258 = sbr.rel (%p256) target = $region32
        $region31: #{apply.1} parent=11 // pred_region
          _
        $region32: #{apply.1} parent=11 // pred_fallthru
          _
        // Predicated region
        $region33: #{apply.1} parent=11 // pred_check
          %p259 = pneg %p193
        $region34: #{apply.1} parent=11 // pred_check_branch
          %261 = sbr.rel (%p259) target = $region36
        $region35: #{apply.1} parent=11 // pred_region
          _
        $region36: #{apply.1} parent=11 // pred_fallthru
          _
      $region12: #{apply.1} parent=5 // pred_fallthru
        _
      %p262 = scmp.lt.s32.totalorder %s15, 2
      // Predicated region
      $region37: #{apply.1} parent=5 // pred_check
        %p263 = pneg %p262
      $region38: #{apply.1} parent=5 // pred_check_branch
        %265 = sbr.rel (%p263) target = $region40
      $region39: #{apply.1} parent=5 // pred_region
        // Predicated region
        $region41: #{apply.1} parent=39 // pred_check
          %p266 = pneg %p35
        $region42: #{apply.1} parent=39 // pred_check_branch
          %268 = sbr.rel (%p266) target = $region44
        $region43: #{apply.1} parent=39 // pred_region
          %p269 = scmp.lt.s32.totalorder %s15, 1
          %s270 = scalar_select %p269, %s15, 1
          %s271 = smul.addr %s270, 8
          %s272 = scalar_lea.vmem %s0, %s271
        $region44: #{apply.1} parent=39 // pred_fallthru
          _
        // Predicated region
        $region45: #{apply.1} parent=39 // pred_check
          %p273 = pneg %p61
        $region46: #{apply.1} parent=39 // pred_check_branch
          %275 = sbr.rel (%p273) target = $region48
        $region47: #{apply.1} parent=39 // pred_region
          %p276 = scmp.lt.s32.totalorder %s15, 1
          %s277 = scalar_select %p276, %s15, 1
          %s278 = smul.addr %s277, 2
          %s279 = smul.addr %s278, 8
          %s280 = scalar_lea.vmem %s1, %s279
        $region48: #{apply.1} parent=39 // pred_fallthru
          _
      $region40: #{apply.1} parent=5 // pred_fallthru
        _
      %p281 = scmp.le.s32.totalorder 1, %s15
      %p282 = scmp.lt.s32.totalorder %s15, 3
      %p283 = pnand %p281, %p282
      %p284 = pneg %p283
      // Predicated region
      $region49: #{apply.1} parent=5 // pred_check
        _
      $region50: #{apply.1} parent=5 // pred_check_branch
        %286 = sbr.rel (%p283) target = $region52
      $region51: #{apply.1} parent=5 // pred_region
        %s287 = ssub.s32 %s15, 1
        // Predicated region
        $region53: #{apply.1} parent=51 // pred_check
          %p288 = pneg %p130
        $region54: #{apply.1} parent=51 // pred_check_branch
          %290 = sbr.rel (%p288) target = $region56
        $region55: #{apply.1} parent=51 // pred_region
          %291 = dma.done [#allocation5], 6912
        $region56: #{apply.1} parent=51 // pred_fallthru
          _
        %p292 = scmp.lt.s32.totalorder %s20, 1
        %s293 = scalar_select %p292, %s20, 1
        %s294 = smul.addr %s293, 8
        %s295 = scalar_lea.vmem %s0, %s294
        %p296 = pneg %p41
        %p297 = pneg %p38
        %p298 = scmp.lt.s32.totalorder %s20, 1
        %s299 = scalar_select %p298, %s20, 1
        %s300 = smul.addr %s299, 2
        %s301 = smul.addr %s300, 8
        %s302 = scalar_lea.vmem %s1, %s301
        %p303 = pneg %p67
        %p304 = pneg %p64
        %p305 = pneg %p88
        %p306 = pneg %p85
        %p307 = pneg %p109
        %p308 = pneg %p106
        %p309 = pneg %p130
        %p310 = pneg %p127
        %p311 = pneg %p151
        %p312 = pneg %p148
        %p313 = pneg %p172
        %p314 = pneg %p169
        %p315 = pneg %p193
        %p316 = pneg %p190
        %p317 = pneg %p219
        %p318 = pneg %p216
        %p319 = scmp.lt.s32.totalorder %s20, 1
        %s320 = scalar_select %p319, %s20, 1
        %s321 = smul.addr %s320, 2
        %s322 = smul.addr %s321, 8
        %s323 = scalar_lea.vmem %s8, %s322
        %p324 = scmp.lt.s32.totalorder %s20, 1
        %s325 = scalar_select %p324, %s20, 1
        %s326 = smul.addr %s325, 8
        %s327 = scalar_lea.vmem %s0, %s326
        %p328 = scmp.lt.s32.totalorder %s20, 1
        %s329 = scalar_select %p328, %s20, 1
        %s330 = smul.addr %s329, 2
        %s331 = smul.addr %s330, 8
        %s332 = scalar_lea.vmem %s1, %s331
        %p333 = scmp.lt.s32.totalorder %s20, 1
        %s334 = scalar_select %p333, %s20, 1
        %s335 = smul.addr %s334, 2
        %s336 = smul.addr %s335, 8
        %s337 = scalar_lea.vmem %s8, %s336
        %338 = vst [vmem:[#allocation2] sm:$0xff] 0.0
        %vm339 = vcmask 130048
        %340 = vst.msk [vmem:[#allocation2 + $0x8] sm:$0xff] %vm339, 0.0
        %341 = vst [vmem:[#allocation2 + $0x10] sm:$0xff] 0.0
        %342 = vst.msk [vmem:[#allocation2 + $0x18] sm:$0xff] %vm339, 0.0
        %343 = vst [vmem:[#allocation2 + $0x20] sm:$0x3] 0.0
        %vm344 = vcmask 123904
        %345 = vst.msk [vmem:[#allocation2 + $0x28] sm:$0x3] %vm344, 0.0
        %346 = vst [vmem:[#allocation3] sm:$0xff] 0.0
        %347 = vst.msk [vmem:[#allocation3 + $0x8] sm:$0xff] %vm339, 0.0
        %348 = vst [vmem:[#allocation3 + $0x10] sm:$0xff] 0.0
        %349 = vst.msk [vmem:[#allocation3 + $0x18] sm:$0xff] %vm339, 0.0
        %350 = vst [vmem:[#allocation3 + $0x20] sm:$0x3] 0.0
        %351 = vst.msk [vmem:[#allocation3 + $0x28] sm:$0x3] %vm344, 0.0
        %v352 = vld [vmem:[%s327] sm:$0xff]
        %v353 = vld [vmem:[%s2] sm:$0xff]
        %v354 = vld [vmem:[%s2 + $0x8] sm:$0xff]
        %v355 = vld [vmem:[%s2 + $0x10] sm:$0xff]
        %v356 = vld [vmem:[%s2 + $0x18] sm:$0xff]
        %v357 = vld [vmem:[%s2 + $0x20] sm:$0xff]
        %v358 = vld [vmem:[%s2 + $0x28] sm:$0xff]
        %v359 = vld [vmem:[%s2 + $0x30] sm:$0xff]
        %v360 = vld [vmem:[%s2 + $0x38] sm:$0xff]
        %vm361 = vcmask 523264
        %v363 = vsel %vm361, %v352, 0
        %365 = vmatprep.subr.mxu0 0.0
        %366 = vmatpush1.msra.mxu0 %v353
        %367 = vmatprep.subr.mxu0 0.0
        %368 = vmatpush1.msra.mxu0 %v354
        %369 = vmatprep.subr.mxu0 0.0
        %370 = vmatpush1.msra.mxu0 %v355
        %371 = vmatprep.subr.mxu0 0.0
        %372 = vmatpush1.msra.mxu0 %v356
        %373 = vmatprep.subr.mxu0 0.0
        %374 = vmatpush1.msra.mxu0 %v357
        %375 = vmatprep.subr.mxu0 0.0
        %376 = vmatpush1.msra.mxu0 %v358
        %377 = vmatprep.subr.mxu0 0.0
        %378 = vmatpush1.msra.mxu0 %v359
        %379 = vmatprep.subr.mxu0 0.0
        %380 = vmatpush1.msra.mxu0 %v360
        %381 = vmatprep.subr.mxu0 0.0
        %382 = vmatpush1.msra.mxu0 0.0
        %383 = vmatprep.subr.mxu0 0.0
        %384 = vmatpush1.msra.mxu0 0.0
        %385 = vmatprep.subr.mxu0 0.0
        %386 = vmatpush1.msra.mxu0 0.0
        %387 = vmatprep.subr.mxu0 0.0
        %388 = vmatpush1.msra.mxu0 0.0
        %389 = vmatprep.subr.mxu0 0.0
        %390 = vmatpush1.msra.mxu0 0.0
        %391 = vmatprep.subr.mxu0 0.0
        %392 = vmatpush1.msra.mxu0 0.0
        %393 = vmatprep.subr.mxu0 0.0
        %394 = vmatpush1.msra.mxu0 0.0
        %395 = vmatprep.subr.mxu0 0.0
        %396 = vmatpush1.msra.mxu0 0.0
        %397 = vmatprep.subr.mxu0 0.0
        %398 = vmatpush1.msra.mxu0 0.0
        %399 = vmatprep.subr.mxu0 0.0
        %400 = vmatpush1.msra.mxu0 0.0
        %401 = vmatprep.subr.mxu0 0.0
        %402 = vmatpush1.msra.mxu0 0.0
        %403 = vmatprep.subr.mxu0 0.0
        %404 = vmatpush1.msra.mxu0 0.0
        %405 = vmatprep.subr.mxu0 0.0
        %406 = vmatpush1.msra.mxu0 0.0
        %407 = vmatprep.subr.mxu0 0.0
        %408 = vmatpush1.msra.mxu0 0.0
        %409 = vmatprep.subr.mxu0 0.0
        %410 = vmatpush1.msra.mxu0 0.0
        %411 = vmatprep.subr.mxu0 0.0
        %412 = vmatpush1.msra.mxu0 0.0
        %413 = vmatprep.subr.mxu0 0.0
        %414 = vmatpush1.msra.mxu0 0.0
        %415 = vmatprep.subr.mxu0 0.0
        %416 = vmatpush1.msra.mxu0 0.0
        %417 = vmatprep.subr.mxu0 0.0
        %418 = vmatpush1.msra.mxu0 0.0
        %419 = vmatprep.subr.mxu0 0.0
        %420 = vmatpush1.msra.mxu0 0.0
        %421 = vmatprep.subr.mxu0 0.0
        %422 = vmatpush1.msra.mxu0 0.0
        %423 = vmatprep.subr.mxu0 0.0
        %424 = vmatpush1.msra.mxu0 0.0
        %425 = vmatprep.subr.mxu0 0.0
        %426 = vmatpush1.msra.mxu0 0.0
        %427 = vmatprep.subr.mxu0 0.0
        %428 = vmatpush1.msra.mxu0 0.0
        %429 = vmatprep.mubr.f32.mxu0 0.0
        %430 = vmatmul.mubr.f32.gmra.mrb[0].mxu0 %v363
        %v431 = vpop.f32.mrb[0].mxu0
        %v432 = vadd.f32 0.0, %v431
        %v433 = vpop.f32.mrb[0].mxu0
        %434 = vdwg.mxu0
        %s435 = scalar_lea.vmem %s2, 64
        %v436 = vld [vmem:[%s435] sm:$0xff]
        %v437 = vld [vmem:[%s435 + $0x8] sm:$0xff]
        %v438 = vld [vmem:[%s435 + $0x10] sm:$0xff]
        %v439 = vld [vmem:[%s435 + $0x18] sm:$0xff]
        %v440 = vld [vmem:[%s435 + $0x20] sm:$0xff]
        %v441 = vld [vmem:[%s435 + $0x28] sm:$0xff]
        %v442 = vld [vmem:[%s435 + $0x30] sm:$0xff]
        %v443 = vld [vmem:[%s435 + $0x38] sm:$0xff]
        %444 = vmatprep.subr.mxu0 0.0
        %445 = vmatpush1.msra.mxu0 %v436
        %446 = vmatprep.subr.mxu0 0.0
        %447 = vmatpush1.msra.mxu0 %v437
        %448 = vmatprep.subr.mxu0 0.0
        %449 = vmatpush1.msra.mxu0 %v438
        %450 = vmatprep.subr.mxu0 0.0
        %451 = vmatpush1.msra.mxu0 %v439
        %452 = vmatprep.subr.mxu0 0.0
        %453 = vmatpush1.msra.mxu0 %v440
        %454 = vmatprep.subr.mxu0 0.0
        %455 = vmatpush1.msra.mxu0 %v441
        %456 = vmatprep.subr.mxu0 0.0
        %457 = vmatpush1.msra.mxu0 %v442
        %458 = vmatprep.subr.mxu0 0.0
        %459 = vmatpush1.msra.mxu0 %v443
        %460 = vmatprep.subr.mxu0 0.0
        %461 = vmatpush1.msra.mxu0 0.0
        %462 = vmatprep.subr.mxu0 0.0
        %463 = vmatpush1.msra.mxu0 0.0
        %464 = vmatprep.subr.mxu0 0.0
        %465 = vmatpush1.msra.mxu0 0.0
        %466 = vmatprep.subr.mxu0 0.0
        %467 = vmatpush1.msra.mxu0 0.0
        %468 = vmatprep.subr.mxu0 0.0
        %469 = vmatpush1.msra.mxu0 0.0
        %470 = vmatprep.subr.mxu0 0.0
        %471 = vmatpush1.msra.mxu0 0.0
        %472 = vmatprep.subr.mxu0 0.0
        %473 = vmatpush1.msra.mxu0 0.0
        %474 = vmatprep.subr.mxu0 0.0
        %475 = vmatpush1.msra.mxu0 0.0
        %476 = vmatprep.subr.mxu0 0.0
        %477 = vmatpush1.msra.mxu0 0.0
        %478 = vmatprep.subr.mxu0 0.0
        %479 = vmatpush1.msra.mxu0 0.0
        %480 = vmatprep.subr.mxu0 0.0
        %481 = vmatpush1.msra.mxu0 0.0
        %482 = vmatprep.subr.mxu0 0.0
        %483 = vmatpush1.msra.mxu0 0.0
        %484 = vmatprep.subr.mxu0 0.0
        %485 = vmatpush1.msra.mxu0 0.0
        %486 = vmatprep.subr.mxu0 0.0
        %487 = vmatpush1.msra.mxu0 0.0
        %488 = vmatprep.subr.mxu0 0.0
        %489 = vmatpush1.msra.mxu0 0.0
        %490 = vmatprep.subr.mxu0 0.0
        %491 = vmatpush1.msra.mxu0 0.0
        %492 = vmatprep.subr.mxu0 0.0
        %493 = vmatpush1.msra.mxu0 0.0
        %494 = vmatprep.subr.mxu0 0.0
        %495 = vmatpush1.msra.mxu0 0.0
        %496 = vmatprep.subr.mxu0 0.0
        %497 = vmatpush1.msra.mxu0 0.0
        %498 = vmatprep.subr.mxu0 0.0
        %499 = vmatpush1.msra.mxu0 0.0
        %500 = vmatprep.subr.mxu0 0.0
        %501 = vmatpush1.msra.mxu0 0.0
        %502 = vmatprep.subr.mxu0 0.0
        %503 = vmatpush1.msra.mxu0 0.0
        %504 = vmatprep.subr.mxu0 0.0
        %505 = vmatpush1.msra.mxu0 0.0
        %506 = vmatprep.subr.mxu0 0.0
        %507 = vmatpush1.msra.mxu0 0.0
        %508 = vmatprep.mubr.f32.mxu0 0.0
        %509 = vmatmul.mubr.f32.gmra.mrb[0].mxu0 %v363
        %v510 = vpop.f32.mrb[0].mxu0
        %v511 = vadd.f32 0.0, %v510
        %v512 = vpop.f32.mrb[0].mxu0
        %513 = vdwg.mxu0
        %v514 = vlaneseq
        %v515 = vshrl.u32 %v514, 7
        %v516 = vadd.s32 %v515, 8
        %v517 = vlaneseq
        %v518 = vand.u32 %v517, 127
        %v519 = vmul.u32 %v518, 2
        %vm520 = vcmp.eq.s32.totalorder %v515, %v519
        %vm521 = vcmp.eq.s32.totalorder %v516, %v519
        %v522 = vsel %vm520, 1, 0
        %v523 = vsel %vm521, 1, 0
        %v524 = vcvt.s32.f32 %v522
        %v525 = vcvt.s32.f32 %v523
        %v526 = vadd.s32 %v519, 1
        %vm527 = vcmp.eq.s32.totalorder %v515, %v526
        %vm528 = vcmp.eq.s32.totalorder %v516, %v526
        %v529 = vsel %vm527, 1, 0
        %v530 = vsel %vm528, 1, 0
        %v531 = vcvt.s32.f32 %v529
        %v532 = vcvt.s32.f32 %v530
        %vm533 = vcmask 64512
        %v535 = vsel %vm533, %v531, 0
        %v538 = vsel %vm533, %v532, 0
        %540 = vmatprep.subr.mxu0 0.0
        %541 = vmatpush1.msra.mxu0 %v511
        %542 = vmatprep.subr.mxu0 0.0
        %543 = vmatpush1.msra.mxu0 0.0
        %544 = vmatprep.subr.mxu0 0.0
        %545 = vmatpush1.msra.mxu0 0.0
        %546 = vmatprep.subr.mxu0 0.0
        %547 = vmatpush1.msra.mxu0 0.0
        %548 = vmatprep.subr.mxu0 0.0
        %549 = vmatpush1.msra.mxu0 0.0
        %550 = vmatprep.subr.mxu0 0.0
        %551 = vmatpush1.msra.mxu0 0.0
        %552 = vmatprep.subr.mxu0 0.0
        %553 = vmatpush1.msra.mxu0 0.0
        %554 = vmatprep.subr.mxu0 0.0
        %555 = vmatpush1.msra.mxu0 0.0
        %556 = vmatprep.subr.mxu0 0.0
        %557 = vmatpush1.msra.mxu0 0.0
        %558 = vmatprep.subr.mxu0 0.0
        %559 = vmatpush1.msra.mxu0 0.0
        %560 = vmatprep.subr.mxu0 0.0
        %561 = vmatpush1.msra.mxu0 0.0
        %562 = vmatprep.subr.mxu0 0.0
        %563 = vmatpush1.msra.mxu0 0.0
        %564 = vmatprep.subr.mxu0 0.0
        %565 = vmatpush1.msra.mxu0 0.0
        %566 = vmatprep.subr.mxu0 0.0
        %567 = vmatpush1.msra.mxu0 0.0
        %568 = vmatprep.subr.mxu0 0.0
        %569 = vmatpush1.msra.mxu0 0.0
        %570 = vmatprep.subr.mxu0 0.0
        %571 = vmatpush1.msra.mxu0 0.0
        %572 = vmatprep.subr.mxu0 0.0
        %573 = vmatpush1.msra.mxu0 0.0
        %574 = vmatprep.subr.mxu0 0.0
        %575 = vmatpush1.msra.mxu0 0.0
        %576 = vmatprep.subr.mxu0 0.0
        %577 = vmatpush1.msra.mxu0 0.0
        %578 = vmatprep.subr.mxu0 0.0
        %579 = vmatpush1.msra.mxu0 0.0
        %580 = vmatprep.subr.mxu0 0.0
        %581 = vmatpush1.msra.mxu0 0.0
        %582 = vmatprep.subr.mxu0 0.0
        %583 = vmatpush1.msra.mxu0 0.0
        %584 = vmatprep.subr.mxu0 0.0
        %585 = vmatpush1.msra.mxu0 0.0
        %586 = vmatprep.subr.mxu0 0.0
        %587 = vmatpush1.msra.mxu0 0.0
        %588 = vmatprep.subr.mxu0 0.0
        %589 = vmatpush1.msra.mxu0 0.0
        %590 = vmatprep.subr.mxu0 0.0
        %591 = vmatpush1.msra.mxu0 0.0
        %592 = vmatprep.subr.mxu0 0.0
        %593 = vmatpush1.msra.mxu0 0.0
        %594 = vmatprep.subr.mxu0 0.0
        %595 = vmatpush1.msra.mxu0 0.0
        %596 = vmatprep.subr.mxu0 0.0
        %597 = vmatpush1.msra.mxu0 0.0
        %598 = vmatprep.subr.mxu0 0.0
        %599 = vmatpush1.msra.mxu0 0.0
        %600 = vmatprep.subr.mxu0 0.0
        %601 = vmatpush1.msra.mxu0 0.0
        %602 = vmatprep.subr.mxu0 0.0
        %603 = vmatpush1.msra.mxu0 0.0
        %604 = vmatprep.mubr.f32.mxu0 0.0
        %605 = vmatmul.mubr.f32.gmra.mrb[0].mxu0 %v535
        %v606 = vpop.f32.mrb[0].mxu0
        %v607 = vadd.f32 0.0, %v606
        %v608 = vpop.f32.mrb[0].mxu0
        %609 = vmatprep.mubr.f32.mxu0 0.0
        %610 = vmatmul.mubr.f32.gmra.mrb[0].mxu0 %v538
        %v611 = vpop.f32.mrb[0].mxu0
        %v612 = vadd.f32 0.0, %v611
        %v613 = vpop.f32.mrb[0].mxu0
        %614 = vdwg.mxu0
        %v616 = vsel %vm533, %v524, 0
        %v619 = vsel %vm533, %v525, 0
        %621 = vmatprep.subr.mxu0 0.0
        %622 = vmatpush1.msra.mxu0 %v432
        %623 = vmatprep.subr.mxu0 0.0
        %624 = vmatpush1.msra.mxu0 0.0
        %625 = vmatprep.subr.mxu0 0.0
        %626 = vmatpush1.msra.mxu0 0.0
        %627 = vmatprep.subr.mxu0 0.0
        %628 = vmatpush1.msra.mxu0 0.0
        %629 = vmatprep.subr.mxu0 0.0
        %630 = vmatpush1.msra.mxu0 0.0
        %631 = vmatprep.subr.mxu0 0.0
        %632 = vmatpush1.msra.mxu0 0.0
        %633 = vmatprep.subr.mxu0 0.0
        %634 = vmatpush1.msra.mxu0 0.0
        %635 = vmatprep.subr.mxu0 0.0
        %636 = vmatpush1.msra.mxu0 0.0
        %637 = vmatprep.subr.mxu0 0.0
        %638 = vmatpush1.msra.mxu0 0.0
        %639 = vmatprep.subr.mxu0 0.0
        %640 = vmatpush1.msra.mxu0 0.0
        %641 = vmatprep.subr.mxu0 0.0
        %642 = vmatpush1.msra.mxu0 0.0
        %643 = vmatprep.subr.mxu0 0.0
        %644 = vmatpush1.msra.mxu0 0.0
        %645 = vmatprep.subr.mxu0 0.0
        %646 = vmatpush1.msra.mxu0 0.0
        %647 = vmatprep.subr.mxu0 0.0
        %648 = vmatpush1.msra.mxu0 0.0
        %649 = vmatprep.subr.mxu0 0.0
        %650 = vmatpush1.msra.mxu0 0.0
        %651 = vmatprep.subr.mxu0 0.0
        %652 = vmatpush1.msra.mxu0 0.0
        %653 = vmatprep.subr.mxu0 0.0
        %654 = vmatpush1.msra.mxu0 0.0
        %655 = vmatprep.subr.mxu0 0.0
        %656 = vmatpush1.msra.mxu0 0.0
        %657 = vmatprep.subr.mxu0 0.0
        %658 = vmatpush1.msra.mxu0 0.0
        %659 = vmatprep.subr.mxu0 0.0
        %660 = vmatpush1.msra.mxu0 0.0
        %661 = vmatprep.subr.mxu0 0.0
        %662 = vmatpush1.msra.mxu0 0.0
        %663 = vmatprep.subr.mxu0 0.0
        %664 = vmatpush1.msra.mxu0 0.0
        %665 = vmatprep.subr.mxu0 0.0
        %666 = vmatpush1.msra.mxu0 0.0
        %667 = vmatprep.subr.mxu0 0.0
        %668 = vmatpush1.msra.mxu0 0.0
        %669 = vmatprep.subr.mxu0 0.0
        %670 = vmatpush1.msra.mxu0 0.0
        %671 = vmatprep.subr.mxu0 0.0
        %672 = vmatpush1.msra.mxu0 0.0
        %673 = vmatprep.subr.mxu0 0.0
        %674 = vmatpush1.msra.mxu0 0.0
        %675 = vmatprep.subr.mxu0 0.0
        %676 = vmatpush1.msra.mxu0 0.0
        %677 = vmatprep.subr.mxu0 0.0
        %678 = vmatpush1.msra.mxu0 0.0
        %679 = vmatprep.subr.mxu0 0.0
        %680 = vmatpush1.msra.mxu0 0.0
        %681 = vmatprep.subr.mxu0 0.0
        %682 = vmatpush1.msra.mxu0 0.0
        %683 = vmatprep.subr.mxu0 0.0
        %684 = vmatpush1.msra.mxu0 0.0
        %685 = vmatprep.mubr.f32.mxu0 0.0
        %686 = vmatmul.mubr.f32.gmra.mrb[0].mxu0 %v616
        %v687 = vpop.f32.mrb[0].mxu0
        %v688 = vadd.f32 %v607, %v687
        %v689 = vpop.f32.mrb[0].mxu0
        %690 = vmatprep.mubr.f32.mxu0 0.0
        %691 = vmatmul.mubr.f32.gmra.mrb[0].mxu0 %v619
        %v692 = vpop.f32.mrb[0].mxu0
        %v693 = vadd.f32 %v612, %v692
        %v694 = vpop.f32.mrb[0].mxu0
        %695 = vdwg.mxu0
        %v696 = vld [vmem:[%s3] sm:$0x1]
        %v698 = vlaneseq
        %v699 = vshrl.u32 %v698, 7
        %v700 = vsub.s32 0, %v699
        %v701 = vrot.slane %v696, %v700
        %v703 = vadd.f32 %v688, %v701
        %v704 = vadd.f32 %v693, %v701
        %vm707 = vcmask 1040384
        %v708 = vrot.slane %v703, 7
        %v709 = vrot.slane %v704, 7
        %v710 = vsel %vm707, %v708, %v709
        %711 = vrot.lane.b32.xlu0 %v708, 4
        %v712 = vpop.permute.xlu0 %711
        %713 = vrot.lane.b32.xlu0 %v710, 4
        %v714 = vpop.permute.xlu0 %713
        %715 = vrot.lane.b32.xlu0 %v709, 4
        %v716 = vpop.permute.xlu0 %715
        %vm720 = vcmask 556065
        %721 = vst.msk [vmem:[#allocation2] sm:$0xfe] %vm720, %v712
        %vm722 = vcmask 556064
        %723 = vst.msk [vmem:[#allocation2 + $0x10] sm:$0xff] %vm722, %v714
        %vm724 = vcmask 548896
        %725 = vst.msk [vmem:[#allocation2 + $0x20] sm:$0x1] %vm724, %v716
        %v726 = vld [vmem:[%s332] sm:$0xff]
        %v727 = vld [vmem:[%s332 + $0x8] sm:$0xff]
        %v730 = vrot.slane %v726, 7
        %v731 = vrot.slane %v727, 7
        %v732 = vsel %vm707, %v730, %v731
        %733 = vrot.lane.b32.xlu0 %v730, 76
        %v734 = vpop.permute.xlu0 %733
        %735 = vrot.lane.b32.xlu0 %v732, 76
        %v736 = vpop.permute.xlu0 %735
        %737 = vrot.lane.b32.xlu0 %v731, 76
        %v738 = vpop.permute.xlu0 %737
        %vm742 = vcmask 1048161
        %743 = vst.msk [vmem:[#allocation2] sm:$0xfe] %vm742, %v734
        %vm744 = vcmask 97281
        %745 = vst.msk [vmem:[#allocation2 + $0x8] sm:$0xfe] %vm744, %v734
        %vm746 = vcmask 1048160
        %747 = vst.msk [vmem:[#allocation2 + $0x10] sm:$0xff] %vm746, %v736
        %vm748 = vcmask 97280
        %749 = vst.msk [vmem:[#allocation2 + $0x18] sm:$0xff] %vm748, %v736
        %vm750 = vcmask 1040992
        %751 = vst.msk [vmem:[#allocation2 + $0x20] sm:$0x1] %vm750, %v738
        %vm752 = vcmask 90112
        %753 = vst.msk [vmem:[#allocation2 + $0x28] sm:$0x1] %vm752, %v738
        %v754 = vld [vmem:[#allocation2] sm:$0xff]
        %v755 = vld [vmem:[#allocation2 + $0x8] sm:$0xff]
        %v756 = vld [vmem:[#allocation2 + $0x10] sm:$0xff]
        %v757 = vld [vmem:[#allocation2 + $0x18] sm:$0xff]
        %v758 = vld [vmem:[#allocation4] sm:$0xff]
        %v759 = vld [vmem:[#allocation4 + $0x8] sm:$0xff]
        %v760 = vld [vmem:[#allocation4 + $0x10] sm:$0xff]
        %v761 = vld [vmem:[#allocation4 + $0x18] sm:$0xff]
        %v762 = vld [vmem:[#allocation4 + $0x20] sm:$0xff]
        %v763 = vld [vmem:[#allocation4 + $0x28] sm:$0xff]
        %v764 = vld [vmem:[#allocation4 + $0x30] sm:$0xff]
        %v765 = vld [vmem:[#allocation4 + $0x38] sm:$0xff]
        %v766 = vld [vmem:[#allocation4 + $0x40] sm:$0xff]
        %v767 = vld [vmem:[#allocation4 + $0x48] sm:$0xff]
        %v768 = vld [vmem:[#allocation4 + $0x50] sm:$0xff]
        %v769 = vld [vmem:[#allocation4 + $0x58] sm:$0xff]
        %v770 = vld [vmem:[#allocation4 + $0x60] sm:$0xff]
        %v771 = vld [vmem:[#allocation4 + $0x68] sm:$0xff]
        %v772 = vld [vmem:[#allocation4 + $0x70] sm:$0xff]
        %v773 = vld [vmem:[#allocation4 + $0x78] sm:$0xff]
        %v774 = vld [vmem:[#allocation4 + $0x80] sm:$0xff]
        %v775 = vld [vmem:[#allocation4 + $0x88] sm:$0xff]
        %v776 = vld [vmem:[#allocation2] sm:$0xfe]
        %v777 = vld [vmem:[#allocation2 + $0x8] sm:$0xfe]
        %v778 = vld [vmem:[#allocation2 + $0x20] sm:$0x1]
        %v779 = vld [vmem:[#allocation2 + $0x28] sm:$0x1]
        %s780 = scalar_lea.vmem [#allocation4], 144
        %v781 = vld [vmem:[%s780] sm:$0xff]
        %v782 = vld [vmem:[%s780 + $0x8] sm:$0xff]
        %v783 = vld [vmem:[%s780 + $0x10] sm:$0xff]
        %v784 = vld [vmem:[%s780 + $0x18] sm:$0xff]
        %v785 = vld [vmem:[%s780 + $0x20] sm:$0xff]
        %v786 = vld [vmem:[%s780 + $0x28] sm:$0xff]
        %v787 = vld [vmem:[%s780 + $0x30] sm:$0xff]
        %v788 = vld [vmem:[%s780 + $0x38] sm:$0xff]
        %v789 = vld [vmem:[%s780 + $0x40] sm:$0xff]
        %v790 = vld [vmem:[%s780 + $0x48] sm:$0xff]
        %v791 = vld [vmem:[%s780 + $0x50] sm:$0xff]
        %v792 = vld [vmem:[%s780 + $0x58] sm:$0xff]
        %v793 = vld [vmem:[%s780 + $0x60] sm:$0xff]
        %v794 = vld [vmem:[%s780 + $0x68] sm:$0xff]
        %v795 = vld [vmem:[%s780 + $0x70] sm:$0xff]
        %v796 = vld [vmem:[%s780 + $0x78] sm:$0xff]
        %v797 = vld [vmem:[%s780 + $0x80] sm:$0xff]
        %v798 = vld [vmem:[%s780 + $0x88] sm:$0xff]
        %vm805 = vcmask 1046528
        %v806 = vrot.slane %v776, 1
        %v807 = vrot.slane %v756, 1
        %v808 = vsel %vm805, %v806, %v807
        %v809 = vrot.slane %v777, 1
        %v810 = vrot.slane %v757, 1
        %v811 = vsel %vm805, %v809, %v810
        %v812 = vrot.slane %v778, 1
        %v813 = vsel %vm805, %v807, %v812
        %v814 = vrot.slane %v779, 1
        %v815 = vsel %vm805, %v810, %v814
        %v818 = vsel %vm339, %v811, 0
        %v820 = vsel %vm339, %v815, 0
        %822 = vmatprep.subr.mxu0 0.0
        %823 = vmatpush1.msra.mxu0 %v781
        %824 = vmatprep.subr.mxu0 0.0
        %825 = vmatpush1.msra.mxu0 %v782
        %826 = vmatprep.subr.mxu0 0.0
        %827 = vmatpush1.msra.mxu0 %v783
        %828 = vmatprep.subr.mxu0 0.0
        %829 = vmatpush1.msra.mxu0 %v784
        %830 = vmatprep.subr.mxu0 0.0
        %831 = vmatpush1.msra.mxu0 %v785
        %832 = vmatprep.subr.mxu0 0.0
        %833 = vmatpush1.msra.mxu0 %v786
        %834 = vmatprep.subr.mxu0 0.0
        %835 = vmatpush1.msra.mxu0 %v787
        %836 = vmatprep.subr.mxu0 0.0
        %837 = vmatpush1.msra.mxu0 %v788
        %838 = vmatprep.subr.mxu0 0.0
        %839 = vmatpush1.msra.mxu0 %v789
        %840 = vmatprep.subr.mxu0 0.0
        %841 = vmatpush1.msra.mxu0 %v790
        %842 = vmatprep.subr.mxu0 0.0
        %843 = vmatpush1.msra.mxu0 %v791
        %844 = vmatprep.subr.mxu0 0.0
        %845 = vmatpush1.msra.mxu0 %v792
        %846 = vmatprep.subr.mxu0 0.0
        %847 = vmatpush1.msra.mxu0 %v793
        %848 = vmatprep.subr.mxu0 0.0
        %849 = vmatpush1.msra.mxu0 %v794
        %850 = vmatprep.subr.mxu0 0.0
        %851 = vmatpush1.msra.mxu0 %v795
        %852 = vmatprep.subr.mxu0 0.0
        %853 = vmatpush1.msra.mxu0 %v796
        %854 = vmatprep.subr.mxu0 0.0
        %855 = vmatpush1.msra.mxu0 %v797
        %856 = vmatprep.subr.mxu0 0.0
        %857 = vmatpush1.msra.mxu0 %v798
        %858 = vmatprep.subr.mxu0 0.0
        %859 = vmatpush1.msra.mxu0 0.0
        %860 = vmatprep.subr.mxu0 0.0
        %861 = vmatpush1.msra.mxu0 0.0
        %862 = vmatprep.subr.mxu0 0.0
        %863 = vmatpush1.msra.mxu0 0.0
        %864 = vmatprep.subr.mxu0 0.0
        %865 = vmatpush1.msra.mxu0 0.0
        %866 = vmatprep.subr.mxu0 0.0
        %867 = vmatpush1.msra.mxu0 0.0
        %868 = vmatprep.subr.mxu0 0.0
        %869 = vmatpush1.msra.mxu0 0.0
        %870 = vmatprep.subr.mxu0 0.0
        %871 = vmatpush1.msra.mxu0 0.0
        %872 = vmatprep.subr.mxu0 0.0
        %873 = vmatpush1.msra.mxu0 0.0
        %874 = vmatprep.subr.mxu0 0.0
        %875 = vmatpush1.msra.mxu0 0.0
        %876 = vmatprep.subr.mxu0 0.0
        %877 = vmatpush1.msra.mxu0 0.0
        %878 = vmatprep.subr.mxu0 0.0
        %879 = vmatpush1.msra.mxu0 0.0
        %880 = vmatprep.subr.mxu0 0.0
        %881 = vmatpush1.msra.mxu0 0.0
        %882 = vmatprep.subr.mxu0 0.0
        %883 = vmatpush1.msra.mxu0 0.0
        %884 = vmatprep.subr.mxu0 0.0
        %885 = vmatpush1.msra.mxu0 0.0
        %886 = vmatprep.mubr.f32.mxu0 %v818
        %887 = vmatmul.mubr.f32.gmra.mrb[0].mxu0 %v808
        %v888 = vpop.f32.mrb[0].mxu0
        %v889 = vadd.f32 0.0, %v888
        %v890 = vpop.f32.mrb[0].mxu0
        %891 = vmatprep.mubr.f32.mxu0 %v820
        %892 = vmatmul.mubr.f32.gmra.mrb[0].mxu0 %v813
        %v893 = vpop.f32.mrb[0].mxu0
        %v894 = vadd.f32 0.0, %v893
        %v895 = vpop.f32.mrb[0].mxu0
        %896 = vdwg.mxu0
        %v898 = vsel %vm339, %v755, 0
        %v900 = vsel %vm339, %v757, 0
        %902 = vmatprep.subr.mxu0 0.0
        %903 = vmatpush1.msra.mxu0 %v758
        %904 = vmatprep.subr.mxu0 0.0
        %905 = vmatpush1.msra.mxu0 %v759
        %906 = vmatprep.subr.mxu0 0.0
        %907 = vmatpush1.msra.mxu0 %v760
        %908 = vmatprep.subr.mxu0 0.0
        %909 = vmatpush1.msra.mxu0 %v761
        %910 = vmatprep.subr.mxu0 0.0
        %911 = vmatpush1.msra.mxu0 %v762
        %912 = vmatprep.subr.mxu0 0.0
        %913 = vmatpush1.msra.mxu0 %v763
        %914 = vmatprep.subr.mxu0 0.0
        %915 = vmatpush1.msra.mxu0 %v764
        %916 = vmatprep.subr.mxu0 0.0
        %917 = vmatpush1.msra.mxu0 %v765
        %918 = vmatprep.subr.mxu0 0.0
        %919 = vmatpush1.msra.mxu0 %v766
        %920 = vmatprep.subr.mxu0 0.0
        %921 = vmatpush1.msra.mxu0 %v767
        %922 = vmatprep.subr.mxu0 0.0
        %923 = vmatpush1.msra.mxu0 %v768
        %924 = vmatprep.subr.mxu0 0.0
        %925 = vmatpush1.msra.mxu0 %v769
        %926 = vmatprep.subr.mxu0 0.0
        %927 = vmatpush1.msra.mxu0 %v770
        %928 = vmatprep.subr.mxu0 0.0
        %929 = vmatpush1.msra.mxu0 %v771
        %930 = vmatprep.subr.mxu0 0.0
        %931 = vmatpush1.msra.mxu0 %v772
        %932 = vmatprep.subr.mxu0 0.0
        %933 = vmatpush1.msra.mxu0 %v773
        %934 = vmatprep.subr.mxu0 0.0
        %935 = vmatpush1.msra.mxu0 %v774
        %936 = vmatprep.subr.mxu0 0.0
        %937 = vmatpush1.msra.mxu0 %v775
        %938 = vmatprep.subr.mxu0 0.0
        %939 = vmatpush1.msra.mxu0 0.0
        %940 = vmatprep.subr.mxu0 0.0
        %941 = vmatpush1.msra.mxu0 0.0
        %942 = vmatprep.subr.mxu0 0.0
        %943 = vmatpush1.msra.mxu0 0.0
        %944 = vmatprep.subr.mxu0 0.0
        %945 = vmatpush1.msra.mxu0 0.0
        %946 = vmatprep.subr.mxu0 0.0
        %947 = vmatpush1.msra.mxu0 0.0
        %948 = vmatprep.subr.mxu0 0.0
        %949 = vmatpush1.msra.mxu0 0.0
        %950 = vmatprep.subr.mxu0 0.0
        %951 = vmatpush1.msra.mxu0 0.0
        %952 = vmatprep.subr.mxu0 0.0
        %953 = vmatpush1.msra.mxu0 0.0
        %954 = vmatprep.subr.mxu0 0.0
        %955 = vmatpush1.msra.mxu0 0.0
        %956 = vmatprep.subr.mxu0 0.0
        %957 = vmatpush1.msra.mxu0 0.0
        %958 = vmatprep.subr.mxu0 0.0
        %959 = vmatpush1.msra.mxu0 0.0
        %960 = vmatprep.subr.mxu0 0.0
        %961 = vmatpush1.msra.mxu0 0.0
        %962 = vmatprep.subr.mxu0 0.0
        %963 = vmatpush1.msra.mxu0 0.0
        %964 = vmatprep.subr.mxu0 0.0
        %965 = vmatpush1.msra.mxu0 0.0
        %966 = vmatprep.mubr.f32.mxu0 %v898
        %967 = vmatmul.mubr.f32.gmra.mrb[0].mxu0 %v754
        %v968 = vpop.f32.mrb[0].mxu0
        %v969 = vadd.f32 %v889, %v968
        %v970 = vpop.f32.mrb[0].mxu0
        %971 = vmatprep.mubr.f32.mxu0 %v900
        %972 = vmatmul.mubr.f32.gmra.mrb[0].mxu0 %v756
        %v973 = vpop.f32.mrb[0].mxu0
        %v974 = vadd.f32 %v894, %v973
        %v975 = vpop.f32.mrb[0].mxu0
        %976 = vdwg.mxu0
        %v977 = vld [vmem:[#allocation2] sm:$0xfc]
        %v978 = vld [vmem:[#allocation2 + $0x8] sm:$0xfc]
        %v979 = vld [vmem:[#allocation2 + $0x20] sm:$0x3]
        %v980 = vld [vmem:[#allocation2 + $0x28] sm:$0x3]
        %s981 = scalar_lea.vmem [#allocation4], 288
        %v982 = vld [vmem:[%s981] sm:$0xff]
        %v983 = vld [vmem:[%s981 + $0x8] sm:$0xff]
        %v984 = vld [vmem:[%s981 + $0x10] sm:$0xff]
        %v985 = vld [vmem:[%s981 + $0x18] sm:$0xff]
        %v986 = vld [vmem:[%s981 + $0x20] sm:$0xff]
        %v987 = vld [vmem:[%s981 + $0x28] sm:$0xff]
        %v988 = vld [vmem:[%s981 + $0x30] sm:$0xff]
        %v989 = vld [vmem:[%s981 + $0x38] sm:$0xff]
        %v990 = vld [vmem:[%s981 + $0x40] sm:$0xff]
        %v991 = vld [vmem:[%s981 + $0x48] sm:$0xff]
        %v992 = vld [vmem:[%s981 + $0x50] sm:$0xff]
        %v993 = vld [vmem:[%s981 + $0x58] sm:$0xff]
        %v994 = vld [vmem:[%s981 + $0x60] sm:$0xff]
        %v995 = vld [vmem:[%s981 + $0x68] sm:$0xff]
        %v996 = vld [vmem:[%s981 + $0x70] sm:$0xff]
        %v997 = vld [vmem:[%s981 + $0x78] sm:$0xff]
        %v998 = vld [vmem:[%s981 + $0x80] sm:$0xff]
        %v999 = vld [vmem:[%s981 + $0x88] sm:$0xff]
        %vm1004 = vcmask 1045504
        %v1005 = vrot.slane %v977, 2
        %v1006 = vrot.slane %v756, 2
        %v1007 = vsel %vm1004, %v1005, %v1006
        %v1008 = vrot.slane %v978, 2
        %v1009 = vrot.slane %v757, 2
        %v1010 = vsel %vm1004, %v1008, %v1009
        %v1011 = vrot.slane %v979, 2
        %v1012 = vsel %vm1004, %v1006, %v1011
        %v1013 = vrot.slane %v980, 2
        %v1014 = vsel %vm1004, %v1009, %v1013
        %v1017 = vsel %vm339, %v1010, 0
        %v1019 = vsel %vm339, %v1014, 0
        %1021 = vmatprep.subr.mxu0 0.0
        %1022 = vmatpush1.msra.mxu0 %v982
        %1023 = vmatprep.subr.mxu0 0.0
        %1024 = vmatpush1.msra.mxu0 %v983
        %1025 = vmatprep.subr.mxu0 0.0
        %1026 = vmatpush1.msra.mxu0 %v984
        %1027 = vmatprep.subr.mxu0 0.0
        %1028 = vmatpush1.msra.mxu0 %v985
        %1029 = vmatprep.subr.mxu0 0.0
        %1030 = vmatpush1.msra.mxu0 %v986
        %1031 = vmatprep.subr.mxu0 0.0
        %1032 = vmatpush1.msra.mxu0 %v987
        %1033 = vmatprep.subr.mxu0 0.0
        %1034 = vmatpush1.msra.mxu0 %v988
        %1035 = vmatprep.subr.mxu0 0.0
        %1036 = vmatpush1.msra.mxu0 %v989
        %1037 = vmatprep.subr.mxu0 0.0
        %1038 = vmatpush1.msra.mxu0 %v990
        %1039 = vmatprep.subr.mxu0 0.0
        %1040 = vmatpush1.msra.mxu0 %v991
        %1041 = vmatprep.subr.mxu0 0.0
        %1042 = vmatpush1.msra.mxu0 %v992
        %1043 = vmatprep.subr.mxu0 0.0
        %1044 = vmatpush1.msra.mxu0 %v993
        %1045 = vmatprep.subr.mxu0 0.0
        %1046 = vmatpush1.msra.mxu0 %v994
        %1047 = vmatprep.subr.mxu0 0.0
        %1048 = vmatpush1.msra.mxu0 %v995
        %1049 = vmatprep.subr.mxu0 0.0
        %1050 = vmatpush1.msra.mxu0 %v996
        %1051 = vmatprep.subr.mxu0 0.0
        %1052 = vmatpush1.msra.mxu0 %v997
        %1053 = vmatprep.subr.mxu0 0.0
        %1054 = vmatpush1.msra.mxu0 %v998
        %1055 = vmatprep.subr.mxu0 0.0
        %1056 = vmatpush1.msra.mxu0 %v999
        %1057 = vmatprep.subr.mxu0 0.0
        %1058 = vmatpush1.msra.mxu0 0.0
        %1059 = vmatprep.subr.mxu0 0.0
        %1060 = vmatpush1.msra.mxu0 0.0
        %1061 = vmatprep.subr.mxu0 0.0
        %1062 = vmatpush1.msra.mxu0 0.0
        %1063 = vmatprep.subr.mxu0 0.0
        %1064 = vmatpush1.msra.mxu0 0.0
        %1065 = vmatprep.subr.mxu0 0.0
        %1066 = vmatpush1.msra.mxu0 0.0
        %1067 = vmatprep.subr.mxu0 0.0
        %1068 = vmatpush1.msra.mxu0 0.0
        %1069 = vmatprep.subr.mxu0 0.0
        %1070 = vmatpush1.msra.mxu0 0.0
        %1071 = vmatprep.subr.mxu0 0.0
        %1072 = vmatpush1.msra.mxu0 0.0
        %1073 = vmatprep.subr.mxu0 0.0
        %1074 = vmatpush1.msra.mxu0 0.0
        %1075 = vmatprep.subr.mxu0 0.0
        %1076 = vmatpush1.msra.mxu0 0.0
        %1077 = vmatprep.subr.mxu0 0.0
        %1078 = vmatpush1.msra.mxu0 0.0
        %1079 = vmatprep.subr.mxu0 0.0
        %1080 = vmatpush1.msra.mxu0 0.0
        %1081 = vmatprep.subr.mxu0 0.0
        %1082 = vmatpush1.msra.mxu0 0.0
        %1083 = vmatprep.subr.mxu0 0.0
        %1084 = vmatpush1.msra.mxu0 0.0
        %1085 = vmatprep.mubr.f32.mxu0 %v1017
        %1086 = vmatmul.mubr.f32.gmra.mrb[0].mxu0 %v1007
        %v1087 = vpop.f32.mrb[0].mxu0
        %v1088 = vadd.f32 0.0, %v1087
        %v1089 = vpop.f32.mrb[0].mxu0
        %1090 = vmatprep.mubr.f32.mxu0 %v1019
        %1091 = vmatmul.mubr.f32.gmra.mrb[0].mxu0 %v1012
        %v1092 = vpop.f32.mrb[0].mxu0
        %v1093 = vadd.f32 0.0, %v1092
        %v1094 = vpop.f32.mrb[0].mxu0
        %1095 = vdwg.mxu0
        %v1096 = vadd.f32 %v969, %v1088
        %v1097 = vadd.f32 %v974, %v1093
        %v1098 = vld [vmem:[%s5] sm:$0x1]
        %v1100 = vlaneseq
        %v1101 = vshrl.u32 %v1100, 7
        %v1102 = vsub.s32 0, %v1101
        %v1103 = vrot.slane %v1098, %v1102
        %v1105 = vadd.f32 %v1096, %v1103
        %v1106 = vadd.f32 %v1097, %v1103
        %v1107 = vmax.f32 %v1105, 0.0
        %v1108 = vmax.f32 %v1106, 0.0
        %v1111 = vrot.slane %v1107, 7
        %v1112 = vrot.slane %v1108, 7
        %v1113 = vsel %vm707, %v1111, %v1112
        %1114 = vrot.lane.b32.xlu0 %v1111, 8
        %v1115 = vpop.permute.xlu0 %1114
        %1116 = vrot.lane.b32.xlu0 %v1113, 8
        %v1117 = vpop.permute.xlu0 %1116
        %1118 = vrot.lane.b32.xlu0 %v1112, 8
        %v1119 = vpop.permute.xlu0 %1118
        %vm1123 = vcmask 1047617
        %1124 = vst.msk [vmem:[#allocation3] sm:$0xfe] %vm1123, %v1115
        %vm1125 = vcmask 64513
        %1126 = vst.msk [vmem:[#allocation3 + $0x8] sm:$0xfe] %vm1125, %v1115
        %vm1127 = vcmask 1047616
        %1128 = vst.msk [vmem:[#allocation3 + $0x10] sm:$0xff] %vm1127, %v1117
        %1129 = vst.msk [vmem:[#allocation3 + $0x18] sm:$0xff] %vm533, %v1117
        %vm1130 = vcmask 1040448
        %1131 = vst.msk [vmem:[#allocation3 + $0x20] sm:$0x1] %vm1130, %v1119
        %vm1132 = vcmask 57344
        %1133 = vst.msk [vmem:[#allocation3 + $0x28] sm:$0x1] %vm1132, %v1119
        %v1134 = vld [vmem:[#allocation3] sm:$0xff]
        %v1135 = vld [vmem:[#allocation3 + $0x8] sm:$0xff]
        %v1136 = vld [vmem:[#allocation3 + $0x10] sm:$0xff]
        %v1137 = vld [vmem:[#allocation3 + $0x18] sm:$0xff]
        %v1138 = vld [vmem:[%s6] sm:$0xff]
        %v1139 = vld [vmem:[%s6 + $0x8] sm:$0xff]
        %v1140 = vld [vmem:[%s6 + $0x10] sm:$0xff]
        %v1141 = vld [vmem:[%s6 + $0x18] sm:$0xff]
        %v1142 = vld [vmem:[%s6 + $0x20] sm:$0xff]
        %v1143 = vld [vmem:[%s6 + $0x28] sm:$0xff]
        %v1144 = vld [vmem:[%s6 + $0x30] sm:$0xff]
        %v1145 = vld [vmem:[%s6 + $0x38] sm:$0xff]
        %v1146 = vld [vmem:[%s6 + $0x40] sm:$0xff]
        %v1147 = vld [vmem:[%s6 + $0x48] sm:$0xff]
        %v1148 = vld [vmem:[%s6 + $0x50] sm:$0xff]
        %v1149 = vld [vmem:[%s6 + $0x58] sm:$0xff]
        %v1150 = vld [vmem:[%s6 + $0x60] sm:$0xff]
        %v1151 = vld [vmem:[%s6 + $0x68] sm:$0xff]
        %v1152 = vld [vmem:[%s6 + $0x70] sm:$0xff]
        %v1153 = vld [vmem:[%s6 + $0x78] sm:$0xff]
        %v1154 = vld [vmem:[%s6 + $0x80] sm:$0xff]
        %v1155 = vld [vmem:[%s6 + $0x88] sm:$0xff]
        %v1156 = vld [vmem:[#allocation3] sm:$0xfe]
        %v1157 = vld [vmem:[#allocation3 + $0x8] sm:$0xfe]
        %v1158 = vld [vmem:[#allocation3 + $0x20] sm:$0x1]
        %v1159 = vld [vmem:[#allocation3 + $0x28] sm:$0x1]
        %s1160 = scalar_lea.vmem %s6, 144
        %v1161 = vld [vmem:[%s1160] sm:$0xff]
        %v1162 = vld [vmem:[%s1160 + $0x8] sm:$0xff]
        %v1163 = vld [vmem:[%s1160 + $0x10] sm:$0xff]
        %v1164 = vld [vmem:[%s1160 + $0x18] sm:$0xff]
        %v1165 = vld [vmem:[%s1160 + $0x20] sm:$0xff]
        %v1166 = vld [vmem:[%s1160 + $0x28] sm:$0xff]
        %v1167 = vld [vmem:[%s1160 + $0x30] sm:$0xff]
        %v1168 = vld [vmem:[%s1160 + $0x38] sm:$0xff]
        %v1169 = vld [vmem:[%s1160 + $0x40] sm:$0xff]
        %v1170 = vld [vmem:[%s1160 + $0x48] sm:$0xff]
        %v1171 = vld [vmem:[%s1160 + $0x50] sm:$0xff]
        %v1172 = vld [vmem:[%s1160 + $0x58] sm:$0xff]
        %v1173 = vld [vmem:[%s1160 + $0x60] sm:$0xff]
        %v1174 = vld [vmem:[%s1160 + $0x68] sm:$0xff]
        %v1175 = vld [vmem:[%s1160 + $0x70] sm:$0xff]
        %v1176 = vld [vmem:[%s1160 + $0x78] sm:$0xff]
        %v1177 = vld [vmem:[%s1160 + $0x80] sm:$0xff]
        %v1178 = vld [vmem:[%s1160 + $0x88] sm:$0xff]
        %v1185 = vrot.slane %v1156, 1
        %v1186 = vrot.slane %v1136, 1
        %v1187 = vsel %vm805, %v1185, %v1186
        %v1188 = vrot.slane %v1157, 1
        %v1189 = vrot.slane %v1137, 1
        %v1190 = vsel %vm805, %v1188, %v1189
        %v1191 = vrot.slane %v1158, 1
        %v1192 = vsel %vm805, %v1186, %v1191
        %v1193 = vrot.slane %v1159, 1
        %v1194 = vsel %vm805, %v1189, %v1193
        %v1197 = vsel %vm339, %v1190, 0
        %v1199 = vsel %vm339, %v1194, 0
        %1201 = vmatprep.subr.mxu0 0.0
        %1202 = vmatpush1.msra.mxu0 %v1161
        %1203 = vmatprep.subr.mxu0 0.0
        %1204 = vmatpush1.msra.mxu0 %v1162
        %1205 = vmatprep.subr.mxu0 0.0
        %1206 = vmatpush1.msra.mxu0 %v1163
        %1207 = vmatprep.subr.mxu0 0.0
        %1208 = vmatpush1.msra.mxu0 %v1164
        %1209 = vmatprep.subr.mxu0 0.0
        %1210 = vmatpush1.msra.mxu0 %v1165
        %1211 = vmatprep.subr.mxu0 0.0
        %1212 = vmatpush1.msra.mxu0 %v1166
        %1213 = vmatprep.subr.mxu0 0.0
        %1214 = vmatpush1.msra.mxu0 %v1167
        %1215 = vmatprep.subr.mxu0 0.0
        %1216 = vmatpush1.msra.mxu0 %v1168
        %1217 = vmatprep.subr.mxu0 0.0
        %1218 = vmatpush1.msra.mxu0 %v1169
        %1219 = vmatprep.subr.mxu0 0.0
        %1220 = vmatpush1.msra.mxu0 %v1170
        %1221 = vmatprep.subr.mxu0 0.0
        %1222 = vmatpush1.msra.mxu0 %v1171
        %1223 = vmatprep.subr.mxu0 0.0
        %1224 = vmatpush1.msra.mxu0 %v1172
        %1225 = vmatprep.subr.mxu0 0.0
        %1226 = vmatpush1.msra.mxu0 %v1173
        %1227 = vmatprep.subr.mxu0 0.0
        %1228 = vmatpush1.msra.mxu0 %v1174
        %1229 = vmatprep.subr.mxu0 0.0
        %1230 = vmatpush1.msra.mxu0 %v1175
        %1231 = vmatprep.subr.mxu0 0.0
        %1232 = vmatpush1.msra.mxu0 %v1176
        %1233 = vmatprep.subr.mxu0 0.0
        %1234 = vmatpush1.msra.mxu0 %v1177
        %1235 = vmatprep.subr.mxu0 0.0
        %1236 = vmatpush1.msra.mxu0 %v1178
        %1237 = vmatprep.subr.mxu0 0.0
        %1238 = vmatpush1.msra.mxu0 0.0
        %1239 = vmatprep.subr.mxu0 0.0
        %1240 = vmatpush1.msra.mxu0 0.0
        %1241 = vmatprep.subr.mxu0 0.0
        %1242 = vmatpush1.msra.mxu0 0.0
        %1243 = vmatprep.subr.mxu0 0.0
        %1244 = vmatpush1.msra.mxu0 0.0
        %1245 = vmatprep.subr.mxu0 0.0
        %1246 = vmatpush1.msra.mxu0 0.0
        %1247 = vmatprep.subr.mxu0 0.0
        %1248 = vmatpush1.msra.mxu0 0.0
        %1249 = vmatprep.subr.mxu0 0.0
        %1250 = vmatpush1.msra.mxu0 0.0
        %1251 = vmatprep.subr.mxu0 0.0
        %1252 = vmatpush1.msra.mxu0 0.0
        %1253 = vmatprep.subr.mxu0 0.0
        %1254 = vmatpush1.msra.mxu0 0.0
        %1255 = vmatprep.subr.mxu0 0.0
        %1256 = vmatpush1.msra.mxu0 0.0
        %1257 = vmatprep.subr.mxu0 0.0
        %1258 = vmatpush1.msra.mxu0 0.0
        %1259 = vmatprep.subr.mxu0 0.0
        %1260 = vmatpush1.msra.mxu0 0.0
        %1261 = vmatprep.subr.mxu0 0.0
        %1262 = vmatpush1.msra.mxu0 0.0
        %1263 = vmatprep.subr.mxu0 0.0
        %1264 = vmatpush1.msra.mxu0 0.0
        %1265 = vmatprep.mubr.f32.mxu0 %v1197
        %1266 = vmatmul.mubr.f32.gmra.mrb[0].mxu0 %v1187
        %v1267 = vpop.f32.mrb[0].mxu0
        %v1268 = vadd.f32 0.0, %v1267
        %v1269 = vpop.f32.mrb[0].mxu0
        %1270 = vmatprep.mubr.f32.mxu0 %v1199
        %1271 = vmatmul.mubr.f32.gmra.mrb[0].mxu0 %v1192
        %v1272 = vpop.f32.mrb[0].mxu0
        %v1273 = vadd.f32 0.0, %v1272
        %v1274 = vpop.f32.mrb[0].mxu0
        %1275 = vdwg.mxu0
        %v1277 = vsel %vm339, %v1135, 0
        %v1279 = vsel %vm339, %v1137, 0
        %1281 = vmatprep.subr.mxu0 0.0
        %1282 = vmatpush1.msra.mxu0 %v1138
        %1283 = vmatprep.subr.mxu0 0.0
        %1284 = vmatpush1.msra.mxu0 %v1139
        %1285 = vmatprep.subr.mxu0 0.0
        %1286 = vmatpush1.msra.mxu0 %v1140
        %1287 = vmatprep.subr.mxu0 0.0
        %1288 = vmatpush1.msra.mxu0 %v1141
        %1289 = vmatprep.subr.mxu0 0.0
        %1290 = vmatpush1.msra.mxu0 %v1142
        %1291 = vmatprep.subr.mxu0 0.0
        %1292 = vmatpush1.msra.mxu0 %v1143
        %1293 = vmatprep.subr.mxu0 0.0
        %1294 = vmatpush1.msra.mxu0 %v1144
        %1295 = vmatprep.subr.mxu0 0.0
        %1296 = vmatpush1.msra.mxu0 %v1145
        %1297 = vmatprep.subr.mxu0 0.0
        %1298 = vmatpush1.msra.mxu0 %v1146
        %1299 = vmatprep.subr.mxu0 0.0
        %1300 = vmatpush1.msra.mxu0 %v1147
        %1301 = vmatprep.subr.mxu0 0.0
        %1302 = vmatpush1.msra.mxu0 %v1148
        %1303 = vmatprep.subr.mxu0 0.0
        %1304 = vmatpush1.msra.mxu0 %v1149
        %1305 = vmatprep.subr.mxu0 0.0
        %1306 = vmatpush1.msra.mxu0 %v1150
        %1307 = vmatprep.subr.mxu0 0.0
        %1308 = vmatpush1.msra.mxu0 %v1151
        %1309 = vmatprep.subr.mxu0 0.0
        %1310 = vmatpush1.msra.mxu0 %v1152
        %1311 = vmatprep.subr.mxu0 0.0
        %1312 = vmatpush1.msra.mxu0 %v1153
        %1313 = vmatprep.subr.mxu0 0.0
        %1314 = vmatpush1.msra.mxu0 %v1154
        %1315 = vmatprep.subr.mxu0 0.0
        %1316 = vmatpush1.msra.mxu0 %v1155
        %1317 = vmatprep.subr.mxu0 0.0
        %1318 = vmatpush1.msra.mxu0 0.0
        %1319 = vmatprep.subr.mxu0 0.0
        %1320 = vmatpush1.msra.mxu0 0.0
        %1321 = vmatprep.subr.mxu0 0.0
        %1322 = vmatpush1.msra.mxu0 0.0
        %1323 = vmatprep.subr.mxu0 0.0
        %1324 = vmatpush1.msra.mxu0 0.0
        %1325 = vmatprep.subr.mxu0 0.0
        %1326 = vmatpush1.msra.mxu0 0.0
        %1327 = vmatprep.subr.mxu0 0.0
        %1328 = vmatpush1.msra.mxu0 0.0
        %1329 = vmatprep.subr.mxu0 0.0
        %1330 = vmatpush1.msra.mxu0 0.0
        %1331 = vmatprep.subr.mxu0 0.0
        %1332 = vmatpush1.msra.mxu0 0.0
        %1333 = vmatprep.subr.mxu0 0.0
        %1334 = vmatpush1.msra.mxu0 0.0
        %1335 = vmatprep.subr.mxu0 0.0
        %1336 = vmatpush1.msra.mxu0 0.0
        %1337 = vmatprep.subr.mxu0 0.0
        %1338 = vmatpush1.msra.mxu0 0.0
        %1339 = vmatprep.subr.mxu0 0.0
        %1340 = vmatpush1.msra.mxu0 0.0
        %1341 = vmatprep.subr.mxu0 0.0
        %1342 = vmatpush1.msra.mxu0 0.0
        %1343 = vmatprep.subr.mxu0 0.0
        %1344 = vmatpush1.msra.mxu0 0.0
        %1345 = vmatprep.mubr.f32.mxu0 %v1277
        %1346 = vmatmul.mubr.f32.gmra.mrb[0].mxu0 %v1134
        %v1347 = vpop.f32.mrb[0].mxu0
        %v1348 = vadd.f32 %v1268, %v1347
        %v1349 = vpop.f32.mrb[0].mxu0
        %1350 = vmatprep.mubr.f32.mxu0 %v1279
        %1351 = vmatmul.mubr.f32.gmra.mrb[0].mxu0 %v1136
        %v1352 = vpop.f32.mrb[0].mxu0
        %v1353 = vadd.f32 %v1273, %v1352
        %v1354 = vpop.f32.mrb[0].mxu0
        %1355 = vdwg.mxu0
        %v1356 = vld [vmem:[#allocation3] sm:$0xfc]
        %v1357 = vld [vmem:[#allocation3 + $0x8] sm:$0xfc]
        %v1358 = vld [vmem:[#allocation3 + $0x20] sm:$0x3]
        %v1359 = vld [vmem:[#allocation3 + $0x28] sm:$0x3]
        %s1360 = scalar_lea.vmem %s6, 288
        %v1361 = vld [vmem:[%s1360] sm:$0xff]
        %v1362 = vld [vmem:[%s1360 + $0x8] sm:$0xff]
        %v1363 = vld [vmem:[%s1360 + $0x10] sm:$0xff]
        %v1364 = vld [vmem:[%s1360 + $0x18] sm:$0xff]
        %v1365 = vld [vmem:[%s1360 + $0x20] sm:$0xff]
        %v1366 = vld [vmem:[%s1360 + $0x28] sm:$0xff]
        %v1367 = vld [vmem:[%s1360 + $0x30] sm:$0xff]
        %v1368 = vld [vmem:[%s1360 + $0x38] sm:$0xff]
        %v1369 = vld [vmem:[%s1360 + $0x40] sm:$0xff]
        %v1370 = vld [vmem:[%s1360 + $0x48] sm:$0xff]
        %v1371 = vld [vmem:[%s1360 + $0x50] sm:$0xff]
        %v1372 = vld [vmem:[%s1360 + $0x58] sm:$0xff]
        %v1373 = vld [vmem:[%s1360 + $0x60] sm:$0xff]
        %v1374 = vld [vmem:[%s1360 + $0x68] sm:$0xff]
        %v1375 = vld [vmem:[%s1360 + $0x70] sm:$0xff]
        %v1376 = vld [vmem:[%s1360 + $0x78] sm:$0xff]
        %v1377 = vld [vmem:[%s1360 + $0x80] sm:$0xff]
        %v1378 = vld [vmem:[%s1360 + $0x88] sm:$0xff]
        %v1383 = vrot.slane %v1356, 2
        %v1384 = vrot.slane %v1136, 2
        %v1385 = vsel %vm1004, %v1383, %v1384
        %v1386 = vrot.slane %v1357, 2
        %v1387 = vrot.slane %v1137, 2
        %v1388 = vsel %vm1004, %v1386, %v1387
        %v1389 = vrot.slane %v1358, 2
        %v1390 = vsel %vm1004, %v1384, %v1389
        %v1391 = vrot.slane %v1359, 2
        %v1392 = vsel %vm1004, %v1387, %v1391
        %v1395 = vsel %vm339, %v1388, 0
        %v1397 = vsel %vm339, %v1392, 0
        %1399 = vmatprep.subr.mxu0 0.0
        %1400 = vmatpush1.msra.mxu0 %v1361
        %1401 = vmatprep.subr.mxu0 0.0
        %1402 = vmatpush1.msra.mxu0 %v1362
        %1403 = vmatprep.subr.mxu0 0.0
        %1404 = vmatpush1.msra.mxu0 %v1363
        %1405 = vmatprep.subr.mxu0 0.0
        %1406 = vmatpush1.msra.mxu0 %v1364
        %1407 = vmatprep.subr.mxu0 0.0
        %1408 = vmatpush1.msra.mxu0 %v1365
        %1409 = vmatprep.subr.mxu0 0.0
        %1410 = vmatpush1.msra.mxu0 %v1366
        %1411 = vmatprep.subr.mxu0 0.0
        %1412 = vmatpush1.msra.mxu0 %v1367
        %1413 = vmatprep.subr.mxu0 0.0
        %1414 = vmatpush1.msra.mxu0 %v1368
        %1415 = vmatprep.subr.mxu0 0.0
        %1416 = vmatpush1.msra.mxu0 %v1369
        %1417 = vmatprep.subr.mxu0 0.0
        %1418 = vmatpush1.msra.mxu0 %v1370
        %1419 = vmatprep.subr.mxu0 0.0
        %1420 = vmatpush1.msra.mxu0 %v1371
        %1421 = vmatprep.subr.mxu0 0.0
        %1422 = vmatpush1.msra.mxu0 %v1372
        %1423 = vmatprep.subr.mxu0 0.0
        %1424 = vmatpush1.msra.mxu0 %v1373
        %1425 = vmatprep.subr.mxu0 0.0
        %1426 = vmatpush1.msra.mxu0 %v1374
        %1427 = vmatprep.subr.mxu0 0.0
        %1428 = vmatpush1.msra.mxu0 %v1375
        %1429 = vmatprep.subr.mxu0 0.0
        %1430 = vmatpush1.msra.mxu0 %v1376
        %1431 = vmatprep.subr.mxu0 0.0
        %1432 = vmatpush1.msra.mxu0 %v1377
        %1433 = vmatprep.subr.mxu0 0.0
        %1434 = vmatpush1.msra.mxu0 %v1378
        %1435 = vmatprep.subr.mxu0 0.0
        %1436 = vmatpush1.msra.mxu0 0.0
        %1437 = vmatprep.subr.mxu0 0.0
        %1438 = vmatpush1.msra.mxu0 0.0
        %1439 = vmatprep.subr.mxu0 0.0
        %1440 = vmatpush1.msra.mxu0 0.0
        %1441 = vmatprep.subr.mxu0 0.0
        %1442 = vmatpush1.msra.mxu0 0.0
        %1443 = vmatprep.subr.mxu0 0.0
        %1444 = vmatpush1.msra.mxu0 0.0
        %1445 = vmatprep.subr.mxu0 0.0
        %1446 = vmatpush1.msra.mxu0 0.0
        %1447 = vmatprep.subr.mxu0 0.0
        %1448 = vmatpush1.msra.mxu0 0.0
        %1449 = vmatprep.subr.mxu0 0.0
        %1450 = vmatpush1.msra.mxu0 0.0
        %1451 = vmatprep.subr.mxu0 0.0
        %1452 = vmatpush1.msra.mxu0 0.0
        %1453 = vmatprep.subr.mxu0 0.0
        %1454 = vmatpush1.msra.mxu0 0.0
        %1455 = vmatprep.subr.mxu0 0.0
        %1456 = vmatpush1.msra.mxu0 0.0
        %1457 = vmatprep.subr.mxu0 0.0
        %1458 = vmatpush1.msra.mxu0 0.0
        %1459 = vmatprep.subr.mxu0 0.0
        %1460 = vmatpush1.msra.mxu0 0.0
        %1461 = vmatprep.subr.mxu0 0.0
        %1462 = vmatpush1.msra.mxu0 0.0
        %1463 = vmatprep.mubr.f32.mxu0 %v1395
        %1464 = vmatmul.mubr.f32.gmra.mrb[0].mxu0 %v1385
        %v1465 = vpop.f32.mrb[0].mxu0
        %v1466 = vadd.f32 0.0, %v1465
        %v1467 = vpop.f32.mrb[0].mxu0
        %1468 = vmatprep.mubr.f32.mxu0 %v1397
        %1469 = vmatmul.mubr.f32.gmra.mrb[0].mxu0 %v1390
        %v1470 = vpop.f32.mrb[0].mxu0
        %v1471 = vadd.f32 0.0, %v1470
        %v1472 = vpop.f32.mrb[0].mxu0
        %1473 = vdwg.mxu0
        %v1474 = vadd.f32 %v1348, %v1466
        %v1475 = vadd.f32 %v1353, %v1471
        %v1476 = vld [vmem:[%s7] sm:$0x1]
        %v1478 = vlaneseq
        %v1479 = vshrl.u32 %v1478, 7
        %v1480 = vsub.s32 0, %v1479
        %v1481 = vrot.slane %v1476, %v1480
        %v1483 = vadd.f32 %v1474, %v1481
        %v1484 = vadd.f32 %v1475, %v1481
        %v1485 = vmax.f32 %v1483, 0.0
        %v1486 = vmax.f32 %v1484, 0.0
        %1487 = vst [vmem:[%s337] sm:$0xff] %v1485
        %1488 = vst [vmem:[%s337 + $0x8] sm:$0xff] %v1486
        %p1489 = scmp.lt.s32.totalorder %s20, 1
        %s1490 = scalar_select %p1489, %s20, 1
        %s1491 = smul.addr %s1490, 2
        %s1492 = smul.addr %s1491, 8
        %s1493 = scalar_lea.vmem %s8, %s1492
        // Predicated region
        $region57: #{apply.1} parent=51 // pred_check
          %p1494 = pneg %p216
        $region58: #{apply.1} parent=51 // pred_check_branch
          %1496 = sbr.rel (%p1494) target = $region60
        $region59: #{apply.1} parent=51 // pred_region
          _
        $region60: #{apply.1} parent=51 // pred_fallthru
          _
      $region52: #{apply.1} parent=5 // pred_fallthru
        _
      %p1497 = scmp.le.s32.totalorder 2, %s15
      // Predicated region
      $region61: #{apply.1} parent=5 // pred_check
        %p1498 = pneg %p1497
      $region62: #{apply.1} parent=5 // pred_check_branch
        %1500 = sbr.rel (%p1498) target = $region64
      $region63: #{apply.1} parent=5 // pred_region
        %s1501 = ssub.s32 %s15, 2
        // Predicated region
        $region65: #{apply.1} parent=63 // pred_check
          %p1502 = pneg %p222
        $region66: #{apply.1} parent=63 // pred_check_branch
          %1504 = sbr.rel (%p1502) target = $region68
        $region67: #{apply.1} parent=63 // pred_region
          %p1505 = scmp.lt.s32.totalorder %s21, 1
          %s1506 = scalar_select %p1505, %s21, 1
          %s1507 = smul.addr %s1506, 2
          %s1508 = smul.addr %s1507, 8
          %s1509 = scalar_lea.vmem %s8, %s1508
        $region68: #{apply.1} parent=63 // pred_fallthru
          _
      $region64: #{apply.1} parent=5 // pred_fallthru
        _
    $region6: #{apply.1} parent=1 // loop_footer
      %s19 = sadd.s32 1, %s15
    $region7: #{apply.1} parent=1 // loop_footer_branch
      %14 = sbr.rel target = $region3
    $region8: #{apply.1} parent=1 // loop_exit
      _
    %1510 = vsyncpa [#allocation5], 1
    %s1511 = scalar_lea.sflag [#allocation5], 1
    %1512 = vsyncpa %s1511, 1

</llo_original>
